<compile_context>
chip_gen: v5e
topology: v5e:2x2
jax: 0.10.0
libtpu: 0.0.40
codegen_flags: <defaults>
</compile_context>

<pallas_src>
import functools

import jax
import jax.numpy as jnp
from jax import lax
from jax.experimental import pallas as pl
from jax.experimental.pallas import tpu as pltpu


def _bilstm_kernel(x_ref, wih_ref, whh_ref, b_ref, hc0_ref,
                   hseq_ref, hcfin_ref,
                   gx_sc, *, seq_len, hidden_size, unroll):
    """One LSTM direction (selected by grid axis 0) over the full sequence.

    x_ref:     (T, B, I)   input sequence (same block for both directions)
    wih_ref:   (I, 4H)     W_ih.T for this direction
    whh_ref:   (H, 4H)     W_hh.T for this direction
    b_ref:     (1, 4H)     bias_ih + bias_hh for this direction
    hc0_ref:   (2, B, H)   initial [h0, c0] for this direction
    hseq_ref:  (T, B, H)   per-step hidden states (output)
    hcfin_ref: (2, B, H)   final [h, c] (output)
    gx_sc:     (T, B, 4H)  f32 VMEM scratch holding precomputed input gates
    """
    d = pl.program_id(0)          # 0 = forward, 1 = backward
    T = seq_len
    H = hidden_size
    B = x_ref.shape[1]
    I = x_ref.shape[2]

    # ---- Precompute the input projection for every timestep in one matmul ----
    # (T*B, I) @ (I, 4H) + bias  -> stored in VMEM, indexed per step below.
    x_all = x_ref[...].reshape(T * B, I)
    gx = jnp.dot(x_all, wih_ref[...],
                 preferred_element_type=jnp.float32) + b_ref[...]
    gx_sc[...] = gx.reshape(T, B, 4 * H)

    whh = whh_ref[...]                               # (H, 4H), loop invariant
    h0 = hc0_ref[0].astype(jnp.float32)              # (B, H)
    c0 = hc0_ref[1].astype(jnp.float32)              # (B, H)

    def step(s, carry):
        h_prev, c_prev = carry
        # forward walks t = 0..T-1, backward walks t = T-1..0; the hidden state
        # produced at original time t is stored at slot t in both cases.
        t = jnp.where(d == 0, s, T - 1 - s)
        gates = gx_sc[t] + jnp.dot(h_prev.astype(whh.dtype), whh,
                                   preferred_element_type=jnp.float32)  # (B, 4H)

        i_g = jax.nn.sigmoid(gates[:, 0 * H:1 * H])
        f_g = jax.nn.sigmoid(gates[:, 1 * H:2 * H])
        g_g = jnp.tanh(gates[:, 2 * H:3 * H])
        o_g = jax.nn.sigmoid(gates[:, 3 * H:4 * H])

        c_new = f_g * c_prev + i_g * g_g
        h_new = o_g * jnp.tanh(c_new)

        hseq_ref[t] = h_new.astype(hseq_ref.dtype)
        return (h_new, c_new)

    h_fin, c_fin = lax.fori_loop(0, T, step, (h0, c0), unroll=unroll)

    # Final-state writes happen exactly once, after the recurrence.
    hcfin_ref[0] = h_fin.astype(hcfin_ref.dtype)
    hcfin_ref[1] = c_fin.astype(hcfin_ref.dtype)


def bilstm_forward(x, hn, cn, params, *, matmul_dtype=jnp.float32):
    """Mirrors BiLSTM.forward.

    x: (T, B, I); hn, cn: (2, B, H) (index 0 = forward dir, 1 = backward dir).
    Returns (output (T,B,2H), hidden_forward (2,B,H), hidden_backward (2,B,H)).

    matmul_dtype: switch to jnp.bfloat16 when scaling I/H up — halves weight VMEM
    and uses the native bf16 MXU path; accumulation stays f32 either way.
    """
    (Wf, Rf, Wbf, Rbf), (Wb_, Rb_, Wbb, Rbb) = params
    T, B, I = x.shape
    H = hn.shape[-1]

    def pack(W, R, Wb, Rb):
        wih = W.T.astype(matmul_dtype)                           # (I, 4H)
        whh = R.T.astype(matmul_dtype)                           # (H, 4H)
        bias = (Wb + Rb).reshape(1, 4 * H).astype(jnp.float32)   # (1, 4H)
        return wih, whh, bias

    wih_f, whh_f, b_f = pack(Wf, Rf, Wbf, Rbf)
    wih_b, whh_b, b_b = pack(Wb_, Rb_, Wbb, Rbb)
    wih_all = jnp.stack([wih_f, wih_b], axis=0)              # (2, I, 4H)
    whh_all = jnp.stack([whh_f, whh_b], axis=0)              # (2, H, 4H)
    b_all = jnp.stack([b_f, b_b], axis=0)                    # (2, 1, 4H)
    hc0 = jnp.stack([hn, cn], axis=1).astype(jnp.float32)    # (2, 2, B, H)
    x_in = x.astype(matmul_dtype)

    kernel = functools.partial(
        _bilstm_kernel, seq_len=T, hidden_size=H, unroll=(T <= 32))

    h_seq, hc_fin = pl.pallas_call(
        kernel,
        out_shape=(
            jax.ShapeDtypeStruct((2, T, B, H), jnp.float32),   # per-step h, per dir
            jax.ShapeDtypeStruct((2, 2, B, H), jnp.float32),   # final [h, c], per dir
        ),
        grid_spec=pltpu.PrefetchScalarGridSpec(
            num_scalar_prefetch=0,
            grid=(2,),                                          # direction axis only
            in_specs=[
                pl.BlockSpec((T, B, I), lambda d: (0, 0, 0)),          # x (shared)
                pl.BlockSpec((None, I, 4 * H), lambda d: (d, 0, 0)),   # W_ih.T
                pl.BlockSpec((None, H, 4 * H), lambda d: (d, 0, 0)),   # W_hh.T
                pl.BlockSpec((None, 1, 4 * H), lambda d: (d, 0, 0)),   # bias
                pl.BlockSpec((None, 2, B, H), lambda d: (d, 0, 0, 0)), # [h0, c0]
            ],
            out_specs=[
                pl.BlockSpec((None, T, B, H), lambda d: (d, 0, 0, 0)),
                pl.BlockSpec((None, 2, B, H), lambda d: (d, 0, 0, 0)),
            ],
            scratch_shapes=[
                pltpu.VMEM((T, B, 4 * H), jnp.float32),   # precomputed input gates
            ],
        ),
        compiler_params=pltpu.CompilerParams(
            dimension_semantics=("parallel",)),     # directions -> 2 TCs on v7x
    )(x_in, wih_all, whh_all, b_all, hc0)

    output = jnp.concatenate([h_seq[0], h_seq[1]], axis=-1)    # (T, B, 2H)
    hidden_forward = hc_fin[0]                                 # (2, B, H) = [h, c]
    hidden_backward = hc_fin[1]
    return output, hidden_forward, hidden_backward


# ------------------------ pure-JAX reference (for checking) ------------------
def _lstm_cell_ref(x, h, c, W, R, Wb, Rb):
    y = x @ W.T + Wb + h @ R.T + Rb
    H = h.shape[-1]
    i = jax.nn.sigmoid(y[:, 0 * H:1 * H])
    f = jax.nn.sigmoid(y[:, 1 * H:2 * H])
    g = jnp.tanh(y[:, 2 * H:3 * H])
    o = jax.nn.sigmoid(y[:, 3 * H:4 * H])
    c_new = f * c + i * g
    h_new = o * jnp.tanh(c_new)
    return h_new, c_new


def bilstm_forward_ref(x, hn, cn, params):
    (Wf, Rf, Wbf, Rbf), (Wb_, Rb_, Wbb, Rbb) = params
    T = x.shape[0]
    h, c = hn[0], cn[0]
    fwd = []
    for t in range(T):
        h, c = _lstm_cell_ref(x[t], h, c, Wf, Rf, Wbf, Rbf)
        fwd.append(h)
    hf, cf = h, c
    h, c = hn[1], cn[1]
    bwd = [None] * T
    for t in reversed(range(T)):
        h, c = _lstm_cell_ref(x[t], h, c, Wb_, Rb_, Wbb, Rbb)
        bwd[t] = h
    hb, cb = h, c
    out = jnp.stack([jnp.concatenate([fwd[t], bwd[t]], axis=-1)
                     for t in range(T)], axis=0)
    return out, jnp.stack([hf, cf], 0), jnp.stack([hb, cb], 0)


if __name__ == "__main__":
    T, B, I, H = 8, 8, 16, 32

    key = jax.random.PRNGKey(0)
    keys = jax.random.split(key, 12)
    bound = 1.0 / (H ** 0.5)  # PyTorch LSTMCell default init range

    def u(k, shape):
        return jax.random.uniform(k, shape, jnp.float32, -bound, bound)

    # per-direction cell params: weight_ih (4H,I), weight_hh (4H,H), biases (4H,)
    params_fwd = (u(keys[0], (4 * H, I)), u(keys[1], (4 * H, H)),
                  u(keys[2], (4 * H,)), u(keys[3], (4 * H,)))
    params_bwd = (u(keys[4], (4 * H, I)), u(keys[5], (4 * H, H)),
                  u(keys[6], (4 * H,)), u(keys[7], (4 * H,)))
    params = (params_fwd, params_bwd)

    x = jax.random.normal(keys[8], (T, B, I), jnp.float32)
    hn = jax.random.normal(keys[9], (2, B, H), jnp.float32)
    cn = jax.random.normal(keys[10], (2, B, H), jnp.float32)

    out, hid_f, hid_b = bilstm_forward(x, hn, cn, params)
    jax.block_until_ready((out, hid_f, hid_b))

    out_r, hid_f_r, hid_b_r = bilstm_forward_ref(x, hn, cn, params)
    assert out.shape == (T, B, 2 * H)
    assert hid_f.shape == (2, B, H) and hid_b.shape == (2, B, H)
    assert jnp.allclose(out, out_r, atol=1e-5, rtol=1e-5)
    assert jnp.allclose(hid_f, hid_f_r, atol=1e-5, rtol=1e-5)
    assert jnp.allclose(hid_b, hid_b_r, atol=1e-5, rtol=1e-5)

    print("KERNEL_OK")
</pallas_src>

<mosaic_0001>
module attributes {stable_mosaic.version = 11 : i64} {
  func.func @_bilstm_kernel(%arg0: i32, %arg1: memref<8x8x16xf32, #tpu.memory_space<vmem>>, %arg2: memref<1x16x128xf32, #tpu.memory_space<vmem>>, %arg3: memref<1x32x128xf32, #tpu.memory_space<vmem>>, %arg4: memref<1x1x128xf32, #tpu.memory_space<vmem>>, %arg5: memref<1x2x8x32xf32, #tpu.memory_space<vmem>>, %arg6: memref<1x8x8x32xf32, #tpu.memory_space<vmem>>, %arg7: memref<1x2x8x32xf32, #tpu.memory_space<vmem>>, %arg8: memref<8x8x128xf32, #tpu.memory_space<vmem>>) attributes {dimension_semantics = [#tpu.dimension_semantics<parallel>], iteration_bounds = array<i64: 2>, scalar_prefetch = 0 : i64, scratch_operands = 1 : i64, tpu.core_type = #tpu.core_type<tc>, window_params = [{pipeline_mode = #tpu.pipeline_mode<synchronous>, transform_indices = @transform_0, window_bounds = array<i64: 8, 8, 16>}, {transform_indices = @transform_1, window_bounds = array<i64: 1, 16, 128>}, {transform_indices = @transform_2, window_bounds = array<i64: 1, 32, 128>}, {transform_indices = @transform_3, window_bounds = array<i64: 1, 1, 128>}, {transform_indices = @transform_4, window_bounds = array<i64: 1, 2, 8, 32>}, {transform_indices = @transform_5, window_bounds = array<i64: 1, 8, 8, 32>}, {transform_indices = @transform_6, window_bounds = array<i64: 1, 2, 8, 32>}]} {
    %c0 = arith.constant 0 : index
    %c0_0 = arith.constant 0 : index
    %c0_1 = arith.constant 0 : index
    %0 = vector.load %arg1[%c0, %c0_0, %c0_1] : memref<8x8x16xf32, #tpu.memory_space<vmem>>, vector<8x8x16xf32>
    %1 = vector.shape_cast %0 : vector<8x8x16xf32> to vector<64x16xf32>
    %c0_2 = arith.constant 0 : index
    %c0_3 = arith.constant 0 : index
    %c0_4 = arith.constant 0 : index
    %2 = vector.load %arg2[%c0_2, %c0_3, %c0_4] : memref<1x16x128xf32, #tpu.memory_space<vmem>>, vector<1x16x128xf32>
    %3 = vector.shape_cast %2 : vector<1x16x128xf32> to vector<16x128xf32>
    %cst = arith.constant dense<0.000000e+00> : vector<64x128xf32>
    %4 = tpu.matmul %1, %3, %cst {dimension_numbers = #tpu.dot_dimension_numbers<[1], [0], [0], [1], [0, 0, 1, 1], [], []>} : vector<64x16xf32>, vector<16x128xf32>, vector<64x128xf32> -> vector<64x128xf32>
    %c0_5 = arith.constant 0 : index
    %c0_6 = arith.constant 0 : index
    %c0_7 = arith.constant 0 : index
    %5 = vector.load %arg4[%c0_5, %c0_6, %c0_7] : memref<1x1x128xf32, #tpu.memory_space<vmem>>, vector<1x1x128xf32>
    %6 = vector.shape_cast %5 : vector<1x1x128xf32> to vector<1x128xf32>
    %7 = vector.broadcast %6 : vector<1x128xf32> to vector<64x128xf32>
    %8 = arith.addf %4, %7 : vector<64x128xf32>
    %9 = vector.shape_cast %8 : vector<64x128xf32> to vector<8x8x128xf32>
    %c0_8 = arith.constant 0 : index
    %c0_9 = arith.constant 0 : index
    %c0_10 = arith.constant 0 : index
    %10 = vector.load %arg8[%c0_8, %c0_9, %c0_10] : memref<8x8x128xf32, #tpu.memory_space<vmem>>, vector<8x8x128xf32>
    tpu.vector_store %arg8[%c0_8, %c0_9, %c0_10], %9 {strides = array<i32>} : memref<8x8x128xf32, #tpu.memory_space<vmem>>, vector<8x8x128xf32>,
    %c0_11 = arith.constant 0 : index
    %c0_12 = arith.constant 0 : index
    %c0_13 = arith.constant 0 : index
    %11 = vector.load %arg3[%c0_11, %c0_12, %c0_13] : memref<1x32x128xf32, #tpu.memory_space<vmem>>, vector<1x32x128xf32>
    %12 = vector.shape_cast %11 : vector<1x32x128xf32> to vector<32x128xf32>
    %c0_14 = arith.constant 0 : index
    %c0_15 = arith.constant 0 : index
    %c0_16 = arith.constant 0 : index
    %c0_17 = arith.constant 0 : index
    %13 = vector.load %arg5[%c0_14, %c0_15, %c0_16, %c0_17] : memref<1x2x8x32xf32, #tpu.memory_space<vmem>>, vector<1x1x8x32xf32>
    %14 = vector.shape_cast %13 : vector<1x1x8x32xf32> to vector<8x32xf32>
    %c0_18 = arith.constant 0 : index
    %c1 = arith.constant 1 : index
    %c0_19 = arith.constant 0 : index
    %c0_20 = arith.constant 0 : index
    %15 = vector.load %arg5[%c0_18, %c1, %c0_19, %c0_20] : memref<1x2x8x32xf32, #tpu.memory_space<vmem>>, vector<1x1x8x32xf32>
    %16 = vector.shape_cast %15 : vector<1x1x8x32xf32> to vector<8x32xf32>
    %c0_i32 = arith.constant 0 : i32
    %c0_i32_21 = arith.constant 0 : i32
    %17 = arith.cmpi eq, %arg0, %c0_i32_21 : i32
    %c7_i32 = arith.constant 7 : i32
    %18 = arith.subi %c7_i32, %c0_i32 : i32
    %19 = arith.select %17, %c0_i32, %18 : i32
    %20 = arith.index_cast %19 : i32 to index
    %c0_22 = arith.constant 0 : index
    %c0_23 = arith.constant 0 : index
    %21 = vector.load %arg8[%20, %c0_22, %c0_23] : memref<8x8x128xf32, #tpu.memory_space<vmem>>, vector<1x8x128xf32>
    %22 = vector.shape_cast %21 : vector<1x8x128xf32> to vector<8x128xf32>
    %cst_24 = arith.constant dense<0.000000e+00> : vector<8x128xf32>
    %23 = tpu.matmul %14, %12, %cst_24 {dimension_numbers = #tpu.dot_dimension_numbers<[1], [0], [0], [1], [0, 0, 1, 1], [], []>} : vector<8x32xf32>, vector<32x128xf32>, vector<8x128xf32> -> vector<8x128xf32>
    %24 = arith.addf %22, %23 : vector<8x128xf32>
    %25 = vector.extract_strided_slice %24 {offsets = [0, 0], sizes = [8, 32], strides = [1, 1]} : vector<8x128xf32> to vector<8x32xf32>
    %26 = arith.negf %25 : vector<8x32xf32>
    %27 = math.exp %26 : vector<8x32xf32>
    %cst_25 = arith.constant 1.000000e+00 : f32
    %28 = vector.broadcast %cst_25 : f32 to vector<8x32xf32>
    %29 = arith.addf %28, %27 : vector<8x32xf32>
    %30 = arith.divf %28, %29 : vector<8x32xf32>
    %31 = vector.extract_strided_slice %24 {offsets = [0, 32], sizes = [8, 32], strides = [1, 1]} : vector<8x128xf32> to vector<8x32xf32>
    %32 = arith.negf %31 : vector<8x32xf32>
    %33 = math.exp %32 : vector<8x32xf32>
    %cst_26 = arith.constant 1.000000e+00 : f32
    %34 = vector.broadcast %cst_26 : f32 to vector<8x32xf32>
    %35 = arith.addf %34, %33 : vector<8x32xf32>
    %36 = arith.divf %34, %35 : vector<8x32xf32>
    %37 = vector.extract_strided_slice %24 {offsets = [0, 64], sizes = [8, 32], strides = [1, 1]} : vector<8x128xf32> to vector<8x32xf32>
    %38 = math.tanh %37 : vector<8x32xf32>
    %39 = vector.extract_strided_slice %24 {offsets = [0, 96], sizes = [8, 32], strides = [1, 1]} : vector<8x128xf32> to vector<8x32xf32>
    %40 = arith.negf %39 : vector<8x32xf32>
    %41 = math.exp %40 : vector<8x32xf32>
    %cst_27 = arith.constant 1.000000e+00 : f32
    %42 = vector.broadcast %cst_27 : f32 to vector<8x32xf32>
    %43 = arith.addf %42, %41 : vector<8x32xf32>
    %44 = arith.divf %42, %43 : vector<8x32xf32>
    %45 = arith.mulf %36, %16 : vector<8x32xf32>
    %46 = arith.mulf %30, %38 : vector<8x32xf32>
    %47 = arith.addf %45, %46 : vector<8x32xf32>
    %48 = math.tanh %47 : vector<8x32xf32>
    %49 = arith.mulf %44, %48 : vector<8x32xf32>
    %c0_28 = arith.constant 0 : index
    %50 = arith.index_cast %19 : i32 to index
    %c0_29 = arith.constant 0 : index
    %c0_30 = arith.constant 0 : index
    %51 = vector.load %arg6[%c0_28, %50, %c0_29, %c0_30] : memref<1x8x8x32xf32, #tpu.memory_space<vmem>>, vector<1x1x8x32xf32>
    %52 = vector.shape_cast %51 : vector<1x1x8x32xf32> to vector<8x32xf32>
    %53 = vector.shape_cast %49 : vector<8x32xf32> to vector<1x1x8x32xf32>
    tpu.vector_store %arg6[%c0_28, %50, %c0_29, %c0_30], %53 {strides = array<i32>} : memref<1x8x8x32xf32, #tpu.memory_space<vmem>>, vector<1x1x8x32xf32>,
    %c1_i32 = arith.constant 1 : i32
    %c0_i32_31 = arith.constant 0 : i32
    %54 = arith.cmpi eq, %arg0, %c0_i32_31 : i32
    %c7_i32_32 = arith.constant 7 : i32
    %55 = arith.subi %c7_i32_32, %c1_i32 : i32
    %56 = arith.select %54, %c1_i32, %55 : i32
    %57 = arith.index_cast %56 : i32 to index
    %c0_33 = arith.constant 0 : index
    %c0_34 = arith.constant 0 : index
    %58 = vector.load %arg8[%57, %c0_33, %c0_34] : memref<8x8x128xf32, #tpu.memory_space<vmem>>, vector<1x8x128xf32>
    %59 = vector.shape_cast %58 : vector<1x8x128xf32> to vector<8x128xf32>
    %cst_35 = arith.constant dense<0.000000e+00> : vector<8x128xf32>
    %60 = tpu.matmul %49, %12, %cst_35 {dimension_numbers = #tpu.dot_dimension_numbers<[1], [0], [0], [1], [0, 0, 1, 1], [], []>} : vector<8x32xf32>, vector<32x128xf32>, vector<8x128xf32> -> vector<8x128xf32>
    %61 = arith.addf %59, %60 : vector<8x128xf32>
    %62 = vector.extract_strided_slice %61 {offsets = [0, 0], sizes = [8, 32], strides = [1, 1]} : vector<8x128xf32> to vector<8x32xf32>
    %63 = arith.negf %62 : vector<8x32xf32>
    %64 = math.exp %63 : vector<8x32xf32>
    %cst_36 = arith.constant 1.000000e+00 : f32
    %65 = vector.broadcast %cst_36 : f32 to vector<8x32xf32>
    %66 = arith.addf %65, %64 : vector<8x32xf32>
    %67 = arith.divf %65, %66 : vector<8x32xf32>
    %68 = vector.extract_strided_slice %61 {offsets = [0, 32], sizes = [8, 32], strides = [1, 1]} : vector<8x128xf32> to vector<8x32xf32>
    %69 = arith.negf %68 : vector<8x32xf32>
    %70 = math.exp %69 : vector<8x32xf32>
    %cst_37 = arith.constant 1.000000e+00 : f32
    %71 = vector.broadcast %cst_37 : f32 to vector<8x32xf32>
    %72 = arith.addf %71, %70 : vector<8x32xf32>
    %73 = arith.divf %71, %72 : vector<8x32xf32>
    %74 = vector.extract_strided_slice %61 {offsets = [0, 64], sizes = [8, 32], strides = [1, 1]} : vector<8x128xf32> to vector<8x32xf32>
    %75 = math.tanh %74 : vector<8x32xf32>
    %76 = vector.extract_strided_slice %61 {offsets = [0, 96], sizes = [8, 32], strides = [1, 1]} : vector<8x128xf32> to vector<8x32xf32>
    %77 = arith.negf %76 : vector<8x32xf32>
    %78 = math.exp %77 : vector<8x32xf32>
    %cst_38 = arith.constant 1.000000e+00 : f32
    %79 = vector.broadcast %cst_38 : f32 to vector<8x32xf32>
    %80 = arith.addf %79, %78 : vector<8x32xf32>
    %81 = arith.divf %79, %80 : vector<8x32xf32>
    %82 = arith.mulf %73, %47 : vector<8x32xf32>
    %83 = arith.mulf %67, %75 : vector<8x32xf32>
    %84 = arith.addf %82, %83 : vector<8x32xf32>
    %85 = math.tanh %84 : vector<8x32xf32>
    %86 = arith.mulf %81, %85 : vector<8x32xf32>
    %c0_39 = arith.constant 0 : index
    %87 = arith.index_cast %56 : i32 to index
    %c0_40 = arith.constant 0 : index
    %c0_41 = arith.constant 0 : index
    %88 = vector.load %arg6[%c0_39, %87, %c0_40, %c0_41] : memref<1x8x8x32xf32, #tpu.memory_space<vmem>>, vector<1x1x8x32xf32>
    %89 = vector.shape_cast %88 : vector<1x1x8x32xf32> to vector<8x32xf32>
    %90 = vector.shape_cast %86 : vector<8x32xf32> to vector<1x1x8x32xf32>
    tpu.vector_store %arg6[%c0_39, %87, %c0_40, %c0_41], %90 {strides = array<i32>} : memref<1x8x8x32xf32, #tpu.memory_space<vmem>>, vector<1x1x8x32xf32>,
    %c2_i32 = arith.constant 2 : i32
    %c0_i32_42 = arith.constant 0 : i32
    %91 = arith.cmpi eq, %arg0, %c0_i32_42 : i32
    %c7_i32_43 = arith.constant 7 : i32
    %92 = arith.subi %c7_i32_43, %c2_i32 : i32
    %93 = arith.select %91, %c2_i32, %92 : i32
    %94 = arith.index_cast %93 : i32 to index
    %c0_44 = arith.constant 0 : index
    %c0_45 = arith.constant 0 : index
    %95 = vector.load %arg8[%94, %c0_44, %c0_45] : memref<8x8x128xf32, #tpu.memory_space<vmem>>, vector<1x8x128xf32>
    %96 = vector.shape_cast %95 : vector<1x8x128xf32> to vector<8x128xf32>
    %cst_46 = arith.constant dense<0.000000e+00> : vector<8x128xf32>
    %97 = tpu.matmul %86, %12, %cst_46 {dimension_numbers = #tpu.dot_dimension_numbers<[1], [0], [0], [1], [0, 0, 1, 1], [], []>} : vector<8x32xf32>, vector<32x128xf32>, vector<8x128xf32> -> vector<8x128xf32>
    %98 = arith.addf %96, %97 : vector<8x128xf32>
    %99 = vector.extract_strided_slice %98 {offsets = [0, 0], sizes = [8, 32], strides = [1, 1]} : vector<8x128xf32> to vector<8x32xf32>
    %100 = arith.negf %99 : vector<8x32xf32>
    %101 = math.exp %100 : vector<8x32xf32>
    %cst_47 = arith.constant 1.000000e+00 : f32
    %102 = vector.broadcast %cst_47 : f32 to vector<8x32xf32>
    %103 = arith.addf %102, %101 : vector<8x32xf32>
    %104 = arith.divf %102, %103 : vector<8x32xf32>
    %105 = vector.extract_strided_slice %98 {offsets = [0, 32], sizes = [8, 32], strides = [1, 1]} : vector<8x128xf32> to vector<8x32xf32>
    %106 = arith.negf %105 : vector<8x32xf32>
    %107 = math.exp %106 : vector<8x32xf32>
    %cst_48 = arith.constant 1.000000e+00 : f32
    %108 = vector.broadcast %cst_48 : f32 to vector<8x32xf32>
    %109 = arith.addf %108, %107 : vector<8x32xf32>
    %110 = arith.divf %108, %109 : vector<8x32xf32>
    %111 = vector.extract_strided_slice %98 {offsets = [0, 64], sizes = [8, 32], strides = [1, 1]} : vector<8x128xf32> to vector<8x32xf32>
    %112 = math.tanh %111 : vector<8x32xf32>
    %113 = vector.extract_strided_slice %98 {offsets = [0, 96], sizes = [8, 32], strides = [1, 1]} : vector<8x128xf32> to vector<8x32xf32>
    %114 = arith.negf %113 : vector<8x32xf32>
    %115 = math.exp %114 : vector<8x32xf32>
    %cst_49 = arith.constant 1.000000e+00 : f32
    %116 = vector.broadcast %cst_49 : f32 to vector<8x32xf32>
    %117 = arith.addf %116, %115 : vector<8x32xf32>
    %118 = arith.divf %116, %117 : vector<8x32xf32>
    %119 = arith.mulf %110, %84 : vector<8x32xf32>
    %120 = arith.mulf %104, %112 : vector<8x32xf32>
    %121 = arith.addf %119, %120 : vector<8x32xf32>
    %122 = math.tanh %121 : vector<8x32xf32>
    %123 = arith.mulf %118, %122 : vector<8x32xf32>
    %c0_50 = arith.constant 0 : index
    %124 = arith.index_cast %93 : i32 to index
    %c0_51 = arith.constant 0 : index
    %c0_52 = arith.constant 0 : index
    %125 = vector.load %arg6[%c0_50, %124, %c0_51, %c0_52] : memref<1x8x8x32xf32, #tpu.memory_space<vmem>>, vector<1x1x8x32xf32>
    %126 = vector.shape_cast %125 : vector<1x1x8x32xf32> to vector<8x32xf32>
    %127 = vector.shape_cast %123 : vector<8x32xf32> to vector<1x1x8x32xf32>
    tpu.vector_store %arg6[%c0_50, %124, %c0_51, %c0_52], %127 {strides = array<i32>} : memref<1x8x8x32xf32, #tpu.memory_space<vmem>>, vector<1x1x8x32xf32>,
    %c3_i32 = arith.constant 3 : i32
    %c0_i32_53 = arith.constant 0 : i32
    %128 = arith.cmpi eq, %arg0, %c0_i32_53 : i32
    %c7_i32_54 = arith.constant 7 : i32
    %129 = arith.subi %c7_i32_54, %c3_i32 : i32
    %130 = arith.select %128, %c3_i32, %129 : i32
    %131 = arith.index_cast %130 : i32 to index
    %c0_55 = arith.constant 0 : index
    %c0_56 = arith.constant 0 : index
    %132 = vector.load %arg8[%131, %c0_55, %c0_56] : memref<8x8x128xf32, #tpu.memory_space<vmem>>, vector<1x8x128xf32>
    %133 = vector.shape_cast %132 : vector<1x8x128xf32> to vector<8x128xf32>
    %cst_57 = arith.constant dense<0.000000e+00> : vector<8x128xf32>
    %134 = tpu.matmul %123, %12, %cst_57 {dimension_numbers = #tpu.dot_dimension_numbers<[1], [0], [0], [1], [0, 0, 1, 1], [], []>} : vector<8x32xf32>, vector<32x128xf32>, vector<8x128xf32> -> vector<8x128xf32>
    %135 = arith.addf %133, %134 : vector<8x128xf32>
    %136 = vector.extract_strided_slice %135 {offsets = [0, 0], sizes = [8, 32], strides = [1, 1]} : vector<8x128xf32> to vector<8x32xf32>
    %137 = arith.negf %136 : vector<8x32xf32>
    %138 = math.exp %137 : vector<8x32xf32>
    %cst_58 = arith.constant 1.000000e+00 : f32
    %139 = vector.broadcast %cst_58 : f32 to vector<8x32xf32>
    %140 = arith.addf %139, %138 : vector<8x32xf32>
    %141 = arith.divf %139, %140 : vector<8x32xf32>
    %142 = vector.extract_strided_slice %135 {offsets = [0, 32], sizes = [8, 32], strides = [1, 1]} : vector<8x128xf32> to vector<8x32xf32>
    %143 = arith.negf %142 : vector<8x32xf32>
    %144 = math.exp %143 : vector<8x32xf32>
    %cst_59 = arith.constant 1.000000e+00 : f32
    %145 = vector.broadcast %cst_59 : f32 to vector<8x32xf32>
    %146 = arith.addf %145, %144 : vector<8x32xf32>
    %147 = arith.divf %145, %146 : vector<8x32xf32>
    %148 = vector.extract_strided_slice %135 {offsets = [0, 64], sizes = [8, 32], strides = [1, 1]} : vector<8x128xf32> to vector<8x32xf32>
    %149 = math.tanh %148 : vector<8x32xf32>
    %150 = vector.extract_strided_slice %135 {offsets = [0, 96], sizes = [8, 32], strides = [1, 1]} : vector<8x128xf32> to vector<8x32xf32>
    %151 = arith.negf %150 : vector<8x32xf32>
    %152 = math.exp %151 : vector<8x32xf32>
    %cst_60 = arith.constant 1.000000e+00 : f32
    %153 = vector.broadcast %cst_60 : f32 to vector<8x32xf32>
    %154 = arith.addf %153, %152 : vector<8x32xf32>
    %155 = arith.divf %153, %154 : vector<8x32xf32>
    %156 = arith.mulf %147, %121 : vector<8x32xf32>
    %157 = arith.mulf %141, %149 : vector<8x32xf32>
    %158 = arith.addf %156, %157 : vector<8x32xf32>
    %159 = math.tanh %158 : vector<8x32xf32>
    %160 = arith.mulf %155, %159 : vector<8x32xf32>
    %c0_61 = arith.constant 0 : index
    %161 = arith.index_cast %130 : i32 to index
    %c0_62 = arith.constant 0 : index
    %c0_63 = arith.constant 0 : index
    %162 = vector.load %arg6[%c0_61, %161, %c0_62, %c0_63] : memref<1x8x8x32xf32, #tpu.memory_space<vmem>>, vector<1x1x8x32xf32>
    %163 = vector.shape_cast %162 : vector<1x1x8x32xf32> to vector<8x32xf32>
    %164 = vector.shape_cast %160 : vector<8x32xf32> to vector<1x1x8x32xf32>
    tpu.vector_store %arg6[%c0_61, %161, %c0_62, %c0_63], %164 {strides = array<i32>} : memref<1x8x8x32xf32, #tpu.memory_space<vmem>>, vector<1x1x8x32xf32>,
    %c4_i32 = arith.constant 4 : i32
    %c0_i32_64 = arith.constant 0 : i32
    %165 = arith.cmpi eq, %arg0, %c0_i32_64 : i32
    %c7_i32_65 = arith.constant 7 : i32
    %166 = arith.subi %c7_i32_65, %c4_i32 : i32
    %167 = arith.select %165, %c4_i32, %166 : i32
    %168 = arith.index_cast %167 : i32 to index
    %c0_66 = arith.constant 0 : index
    %c0_67 = arith.constant 0 : index
    %169 = vector.load %arg8[%168, %c0_66, %c0_67] : memref<8x8x128xf32, #tpu.memory_space<vmem>>, vector<1x8x128xf32>
    %170 = vector.shape_cast %169 : vector<1x8x128xf32> to vector<8x128xf32>
    %cst_68 = arith.constant dense<0.000000e+00> : vector<8x128xf32>
    %171 = tpu.matmul %160, %12, %cst_68 {dimension_numbers = #tpu.dot_dimension_numbers<[1], [0], [0], [1], [0, 0, 1, 1], [], []>} : vector<8x32xf32>, vector<32x128xf32>, vector<8x128xf32> -> vector<8x128xf32>
    %172 = arith.addf %170, %171 : vector<8x128xf32>
    %173 = vector.extract_strided_slice %172 {offsets = [0, 0], sizes = [8, 32], strides = [1, 1]} : vector<8x128xf32> to vector<8x32xf32>
    %174 = arith.negf %173 : vector<8x32xf32>
    %175 = math.exp %174 : vector<8x32xf32>
    %cst_69 = arith.constant 1.000000e+00 : f32
    %176 = vector.broadcast %cst_69 : f32 to vector<8x32xf32>
    %177 = arith.addf %176, %175 : vector<8x32xf32>
    %178 = arith.divf %176, %177 : vector<8x32xf32>
    %179 = vector.extract_strided_slice %172 {offsets = [0, 32], sizes = [8, 32], strides = [1, 1]} : vector<8x128xf32> to vector<8x32xf32>
    %180 = arith.negf %179 : vector<8x32xf32>
    %181 = math.exp %180 : vector<8x32xf32>
    %cst_70 = arith.constant 1.000000e+00 : f32
    %182 = vector.broadcast %cst_70 : f32 to vector<8x32xf32>
    %183 = arith.addf %182, %181 : vector<8x32xf32>
    %184 = arith.divf %182, %183 : vector<8x32xf32>
    %185 = vector.extract_strided_slice %172 {offsets = [0, 64], sizes = [8, 32], strides = [1, 1]} : vector<8x128xf32> to vector<8x32xf32>
    %186 = math.tanh %185 : vector<8x32xf32>
    %187 = vector.extract_strided_slice %172 {offsets = [0, 96], sizes = [8, 32], strides = [1, 1]} : vector<8x128xf32> to vector<8x32xf32>
    %188 = arith.negf %187 : vector<8x32xf32>
    %189 = math.exp %188 : vector<8x32xf32>
    %cst_71 = arith.constant 1.000000e+00 : f32
    %190 = vector.broadcast %cst_71 : f32 to vector<8x32xf32>
    %191 = arith.addf %190, %189 : vector<8x32xf32>
    %192 = arith.divf %190, %191 : vector<8x32xf32>
    %193 = arith.mulf %184, %158 : vector<8x32xf32>
    %194 = arith.mulf %178, %186 : vector<8x32xf32>
    %195 = arith.addf %193, %194 : vector<8x32xf32>
    %196 = math.tanh %195 : vector<8x32xf32>
    %197 = arith.mulf %192, %196 : vector<8x32xf32>
    %c0_72 = arith.constant 0 : index
    %198 = arith.index_cast %167 : i32 to index
    %c0_73 = arith.constant 0 : index
    %c0_74 = arith.constant 0 : index
    %199 = vector.load %arg6[%c0_72, %198, %c0_73, %c0_74] : memref<1x8x8x32xf32, #tpu.memory_space<vmem>>, vector<1x1x8x32xf32>
    %200 = vector.shape_cast %199 : vector<1x1x8x32xf32> to vector<8x32xf32>
    %201 = vector.shape_cast %197 : vector<8x32xf32> to vector<1x1x8x32xf32>
    tpu.vector_store %arg6[%c0_72, %198, %c0_73, %c0_74], %201 {strides = array<i32>} : memref<1x8x8x32xf32, #tpu.memory_space<vmem>>, vector<1x1x8x32xf32>,
    %c5_i32 = arith.constant 5 : i32
    %c0_i32_75 = arith.constant 0 : i32
    %202 = arith.cmpi eq, %arg0, %c0_i32_75 : i32
    %c7_i32_76 = arith.constant 7 : i32
    %203 = arith.subi %c7_i32_76, %c5_i32 : i32
    %204 = arith.select %202, %c5_i32, %203 : i32
    %205 = arith.index_cast %204 : i32 to index
    %c0_77 = arith.constant 0 : index
    %c0_78 = arith.constant 0 : index
    %206 = vector.load %arg8[%205, %c0_77, %c0_78] : memref<8x8x128xf32, #tpu.memory_space<vmem>>, vector<1x8x128xf32>
    %207 = vector.shape_cast %206 : vector<1x8x128xf32> to vector<8x128xf32>
    %cst_79 = arith.constant dense<0.000000e+00> : vector<8x128xf32>
    %208 = tpu.matmul %197, %12, %cst_79 {dimension_numbers = #tpu.dot_dimension_numbers<[1], [0], [0], [1], [0, 0, 1, 1], [], []>} : vector<8x32xf32>, vector<32x128xf32>, vector<8x128xf32> -> vector<8x128xf32>
    %209 = arith.addf %207, %208 : vector<8x128xf32>
    %210 = vector.extract_strided_slice %209 {offsets = [0, 0], sizes = [8, 32], strides = [1, 1]} : vector<8x128xf32> to vector<8x32xf32>
    %211 = arith.negf %210 : vector<8x32xf32>
    %212 = math.exp %211 : vector<8x32xf32>
    %cst_80 = arith.constant 1.000000e+00 : f32
    %213 = vector.broadcast %cst_80 : f32 to vector<8x32xf32>
    %214 = arith.addf %213, %212 : vector<8x32xf32>
    %215 = arith.divf %213, %214 : vector<8x32xf32>
    %216 = vector.extract_strided_slice %209 {offsets = [0, 32], sizes = [8, 32], strides = [1, 1]} : vector<8x128xf32> to vector<8x32xf32>
    %217 = arith.negf %216 : vector<8x32xf32>
    %218 = math.exp %217 : vector<8x32xf32>
    %cst_81 = arith.constant 1.000000e+00 : f32
    %219 = vector.broadcast %cst_81 : f32 to vector<8x32xf32>
    %220 = arith.addf %219, %218 : vector<8x32xf32>
    %221 = arith.divf %219, %220 : vector<8x32xf32>
    %222 = vector.extract_strided_slice %209 {offsets = [0, 64], sizes = [8, 32], strides = [1, 1]} : vector<8x128xf32> to vector<8x32xf32>
    %223 = math.tanh %222 : vector<8x32xf32>
    %224 = vector.extract_strided_slice %209 {offsets = [0, 96], sizes = [8, 32], strides = [1, 1]} : vector<8x128xf32> to vector<8x32xf32>
    %225 = arith.negf %224 : vector<8x32xf32>
    %226 = math.exp %225 : vector<8x32xf32>
    %cst_82 = arith.constant 1.000000e+00 : f32
    %227 = vector.broadcast %cst_82 : f32 to vector<8x32xf32>
    %228 = arith.addf %227, %226 : vector<8x32xf32>
    %229 = arith.divf %227, %228 : vector<8x32xf32>
    %230 = arith.mulf %221, %195 : vector<8x32xf32>
    %231 = arith.mulf %215, %223 : vector<8x32xf32>
    %232 = arith.addf %230, %231 : vector<8x32xf32>
    %233 = math.tanh %232 : vector<8x32xf32>
    %234 = arith.mulf %229, %233 : vector<8x32xf32>
    %c0_83 = arith.constant 0 : index
    %235 = arith.index_cast %204 : i32 to index
    %c0_84 = arith.constant 0 : index
    %c0_85 = arith.constant 0 : index
    %236 = vector.load %arg6[%c0_83, %235, %c0_84, %c0_85] : memref<1x8x8x32xf32, #tpu.memory_space<vmem>>, vector<1x1x8x32xf32>
    %237 = vector.shape_cast %236 : vector<1x1x8x32xf32> to vector<8x32xf32>
    %238 = vector.shape_cast %234 : vector<8x32xf32> to vector<1x1x8x32xf32>
    tpu.vector_store %arg6[%c0_83, %235, %c0_84, %c0_85], %238 {strides = array<i32>} : memref<1x8x8x32xf32, #tpu.memory_space<vmem>>, vector<1x1x8x32xf32>,
    %c6_i32 = arith.constant 6 : i32
    %c0_i32_86 = arith.constant 0 : i32
    %239 = arith.cmpi eq, %arg0, %c0_i32_86 : i32
    %c7_i32_87 = arith.constant 7 : i32
    %240 = arith.subi %c7_i32_87, %c6_i32 : i32
    %241 = arith.select %239, %c6_i32, %240 : i32
    %242 = arith.index_cast %241 : i32 to index
    %c0_88 = arith.constant 0 : index
    %c0_89 = arith.constant 0 : index
    %243 = vector.load %arg8[%242, %c0_88, %c0_89] : memref<8x8x128xf32, #tpu.memory_space<vmem>>, vector<1x8x128xf32>
    %244 = vector.shape_cast %243 : vector<1x8x128xf32> to vector<8x128xf32>
    %cst_90 = arith.constant dense<0.000000e+00> : vector<8x128xf32>
    %245 = tpu.matmul %234, %12, %cst_90 {dimension_numbers = #tpu.dot_dimension_numbers<[1], [0], [0], [1], [0, 0, 1, 1], [], []>} : vector<8x32xf32>, vector<32x128xf32>, vector<8x128xf32> -> vector<8x128xf32>
    %246 = arith.addf %244, %245 : vector<8x128xf32>
    %247 = vector.extract_strided_slice %246 {offsets = [0, 0], sizes = [8, 32], strides = [1, 1]} : vector<8x128xf32> to vector<8x32xf32>
    %248 = arith.negf %247 : vector<8x32xf32>
    %249 = math.exp %248 : vector<8x32xf32>
    %cst_91 = arith.constant 1.000000e+00 : f32
    %250 = vector.broadcast %cst_91 : f32 to vector<8x32xf32>
    %251 = arith.addf %250, %249 : vector<8x32xf32>
    %252 = arith.divf %250, %251 : vector<8x32xf32>
    %253 = vector.extract_strided_slice %246 {offsets = [0, 32], sizes = [8, 32], strides = [1, 1]} : vector<8x128xf32> to vector<8x32xf32>
    %254 = arith.negf %253 : vector<8x32xf32>
    %255 = math.exp %254 : vector<8x32xf32>
    %cst_92 = arith.constant 1.000000e+00 : f32
    %256 = vector.broadcast %cst_92 : f32 to vector<8x32xf32>
    %257 = arith.addf %256, %255 : vector<8x32xf32>
    %258 = arith.divf %256, %257 : vector<8x32xf32>
    %259 = vector.extract_strided_slice %246 {offsets = [0, 64], sizes = [8, 32], strides = [1, 1]} : vector<8x128xf32> to vector<8x32xf32>
    %260 = math.tanh %259 : vector<8x32xf32>
    %261 = vector.extract_strided_slice %246 {offsets = [0, 96], sizes = [8, 32], strides = [1, 1]} : vector<8x128xf32> to vector<8x32xf32>
    %262 = arith.negf %261 : vector<8x32xf32>
    %263 = math.exp %262 : vector<8x32xf32>
    %cst_93 = arith.constant 1.000000e+00 : f32
    %264 = vector.broadcast %cst_93 : f32 to vector<8x32xf32>
    %265 = arith.addf %264, %263 : vector<8x32xf32>
    %266 = arith.divf %264, %265 : vector<8x32xf32>
    %267 = arith.mulf %258, %232 : vector<8x32xf32>
    %268 = arith.mulf %252, %260 : vector<8x32xf32>
    %269 = arith.addf %267, %268 : vector<8x32xf32>
    %270 = math.tanh %269 : vector<8x32xf32>
    %271 = arith.mulf %266, %270 : vector<8x32xf32>
    %c0_94 = arith.constant 0 : index
    %272 = arith.index_cast %241 : i32 to index
    %c0_95 = arith.constant 0 : index
    %c0_96 = arith.constant 0 : index
    %273 = vector.load %arg6[%c0_94, %272, %c0_95, %c0_96] : memref<1x8x8x32xf32, #tpu.memory_space<vmem>>, vector<1x1x8x32xf32>
    %274 = vector.shape_cast %273 : vector<1x1x8x32xf32> to vector<8x32xf32>
    %275 = vector.shape_cast %271 : vector<8x32xf32> to vector<1x1x8x32xf32>
    tpu.vector_store %arg6[%c0_94, %272, %c0_95, %c0_96], %275 {strides = array<i32>} : memref<1x8x8x32xf32, #tpu.memory_space<vmem>>, vector<1x1x8x32xf32>,
    %c7_i32_97 = arith.constant 7 : i32
    %c0_i32_98 = arith.constant 0 : i32
    %276 = arith.cmpi eq, %arg0, %c0_i32_98 : i32
    %c7_i32_99 = arith.constant 7 : i32
    %277 = arith.subi %c7_i32_99, %c7_i32_97 : i32
    %278 = arith.select %276, %c7_i32_97, %277 : i32
    %279 = arith.index_cast %278 : i32 to index
    %c0_100 = arith.constant 0 : index
    %c0_101 = arith.constant 0 : index
    %280 = vector.load %arg8[%279, %c0_100, %c0_101] : memref<8x8x128xf32, #tpu.memory_space<vmem>>, vector<1x8x128xf32>
    %281 = vector.shape_cast %280 : vector<1x8x128xf32> to vector<8x128xf32>
    %cst_102 = arith.constant dense<0.000000e+00> : vector<8x128xf32>
    %282 = tpu.matmul %271, %12, %cst_102 {dimension_numbers = #tpu.dot_dimension_numbers<[1], [0], [0], [1], [0, 0, 1, 1], [], []>} : vector<8x32xf32>, vector<32x128xf32>, vector<8x128xf32> -> vector<8x128xf32>
    %283 = arith.addf %281, %282 : vector<8x128xf32>
    %284 = vector.extract_strided_slice %283 {offsets = [0, 0], sizes = [8, 32], strides = [1, 1]} : vector<8x128xf32> to vector<8x32xf32>
    %285 = arith.negf %284 : vector<8x32xf32>
    %286 = math.exp %285 : vector<8x32xf32>
    %cst_103 = arith.constant 1.000000e+00 : f32
    %287 = vector.broadcast %cst_103 : f32 to vector<8x32xf32>
    %288 = arith.addf %287, %286 : vector<8x32xf32>
    %289 = arith.divf %287, %288 : vector<8x32xf32>
    %290 = vector.extract_strided_slice %283 {offsets = [0, 32], sizes = [8, 32], strides = [1, 1]} : vector<8x128xf32> to vector<8x32xf32>
    %291 = arith.negf %290 : vector<8x32xf32>
    %292 = math.exp %291 : vector<8x32xf32>
    %cst_104 = arith.constant 1.000000e+00 : f32
    %293 = vector.broadcast %cst_104 : f32 to vector<8x32xf32>
    %294 = arith.addf %293, %292 : vector<8x32xf32>
    %295 = arith.divf %293, %294 : vector<8x32xf32>
    %296 = vector.extract_strided_slice %283 {offsets = [0, 64], sizes = [8, 32], strides = [1, 1]} : vector<8x128xf32> to vector<8x32xf32>
    %297 = math.tanh %296 : vector<8x32xf32>
    %298 = vector.extract_strided_slice %283 {offsets = [0, 96], sizes = [8, 32], strides = [1, 1]} : vector<8x128xf32> to vector<8x32xf32>
    %299 = arith.negf %298 : vector<8x32xf32>
    %300 = math.exp %299 : vector<8x32xf32>
    %cst_105 = arith.constant 1.000000e+00 : f32
    %301 = vector.broadcast %cst_105 : f32 to vector<8x32xf32>
    %302 = arith.addf %301, %300 : vector<8x32xf32>
    %303 = arith.divf %301, %302 : vector<8x32xf32>
    %304 = arith.mulf %295, %269 : vector<8x32xf32>
    %305 = arith.mulf %289, %297 : vector<8x32xf32>
    %306 = arith.addf %304, %305 : vector<8x32xf32>
    %307 = math.tanh %306 : vector<8x32xf32>
    %308 = arith.mulf %303, %307 : vector<8x32xf32>
    %c0_106 = arith.constant 0 : index
    %309 = arith.index_cast %278 : i32 to index
    %c0_107 = arith.constant 0 : index
    %c0_108 = arith.constant 0 : index
    %310 = vector.load %arg6[%c0_106, %309, %c0_107, %c0_108] : memref<1x8x8x32xf32, #tpu.memory_space<vmem>>, vector<1x1x8x32xf32>
    %311 = vector.shape_cast %310 : vector<1x1x8x32xf32> to vector<8x32xf32>
    %312 = vector.shape_cast %308 : vector<8x32xf32> to vector<1x1x8x32xf32>
    tpu.vector_store %arg6[%c0_106, %309, %c0_107, %c0_108], %312 {strides = array<i32>} : memref<1x8x8x32xf32, #tpu.memory_space<vmem>>, vector<1x1x8x32xf32>,
    %c8_i32 = arith.constant 8 : i32
    %c0_109 = arith.constant 0 : index
    %c0_110 = arith.constant 0 : index
    %c0_111 = arith.constant 0 : index
    %c0_112 = arith.constant 0 : index
    %313 = vector.load %arg7[%c0_109, %c0_110, %c0_111, %c0_112] : memref<1x2x8x32xf32, #tpu.memory_space<vmem>>, vector<1x1x8x32xf32>
    %314 = vector.shape_cast %313 : vector<1x1x8x32xf32> to vector<8x32xf32>
    %315 = vector.shape_cast %308 : vector<8x32xf32> to vector<1x1x8x32xf32>
    tpu.vector_store %arg7[%c0_109, %c0_110, %c0_111, %c0_112], %315 {strides = array<i32>} : memref<1x2x8x32xf32, #tpu.memory_space<vmem>>, vector<1x1x8x32xf32>,
    %c0_113 = arith.constant 0 : index
    %c1_114 = arith.constant 1 : index
    %c0_115 = arith.constant 0 : index
    %c0_116 = arith.constant 0 : index
    %316 = vector.load %arg7[%c0_113, %c1_114, %c0_115, %c0_116] : memref<1x2x8x32xf32, #tpu.memory_space<vmem>>, vector<1x1x8x32xf32>
    %317 = vector.shape_cast %316 : vector<1x1x8x32xf32> to vector<8x32xf32>
    %318 = vector.shape_cast %306 : vector<8x32xf32> to vector<1x1x8x32xf32>
    tpu.vector_store %arg7[%c0_113, %c1_114, %c0_115, %c0_116], %318 {strides = array<i32>} : memref<1x2x8x32xf32, #tpu.memory_space<vmem>>, vector<1x1x8x32xf32>,
    return
  }
  func.func @transform_0(%arg0: i32) -> (i32, i32, i32) {
    %c0_i32 = arith.constant 0 : i32
    %c0_i32_0 = arith.constant 0 : i32
    %c0_i32_1 = arith.constant 0 : i32
    %c0_i32_2 = arith.constant 0 : i32
    return %c0_i32, %c0_i32_0, %c0_i32_1 : i32, i32, i32
  }
  func.func @transform_1(%arg0: i32) -> (i32, i32, i32) {
    %c0_i32 = arith.constant 0 : i32
    %c0_i32_0 = arith.constant 0 : i32
    %c0_i32_1 = arith.constant 0 : i32
    return %arg0, %c0_i32, %c0_i32_0 : i32, i32, i32
  }
  func.func @transform_2(%arg0: i32) -> (i32, i32, i32) {
    %c0_i32 = arith.constant 0 : i32
    %c0_i32_0 = arith.constant 0 : i32
    %c0_i32_1 = arith.constant 0 : i32
    return %arg0, %c0_i32, %c0_i32_0 : i32, i32, i32
  }
  func.func @transform_3(%arg0: i32) -> (i32, i32, i32) {
    %c0_i32 = arith.constant 0 : i32
    %c0_i32_0 = arith.constant 0 : i32
    %c0_i32_1 = arith.constant 0 : i32
    return %arg0, %c0_i32, %c0_i32_0 : i32, i32, i32
  }
  func.func @transform_4(%arg0: i32) -> (i32, i32, i32, i32) {
    %c0_i32 = arith.constant 0 : i32
    %c0_i32_0 = arith.constant 0 : i32
    %c0_i32_1 = arith.constant 0 : i32
    %c0_i32_2 = arith.constant 0 : i32
    return %arg0, %c0_i32, %c0_i32_0, %c0_i32_1 : i32, i32, i32, i32
  }
  func.func @transform_5(%arg0: i32) -> (i32, i32, i32, i32) {
    %c0_i32 = arith.constant 0 : i32
    %c0_i32_0 = arith.constant 0 : i32
    %c0_i32_1 = arith.constant 0 : i32
    %c0_i32_2 = arith.constant 0 : i32
    return %arg0, %c0_i32, %c0_i32_0, %c0_i32_1 : i32, i32, i32, i32
  }
  func.func @transform_6(%arg0: i32) -> (i32, i32, i32, i32) {
    %c0_i32 = arith.constant 0 : i32
    %c0_i32_0 = arith.constant 0 : i32
    %c0_i32_1 = arith.constant 0 : i32
    %c0_i32_2 = arith.constant 0 : i32
    return %arg0, %c0_i32, %c0_i32_0, %c0_i32_1 : i32, i32, i32, i32
  }
}

</mosaic_0001>

<llo_original>
// kernel: tpu_custom_call.1
$region0: #{tpu_custom_call.1}
  #allocation0 [shape = 'u32[]', space=smem, size = 0x4, offset = 0x4, fixed_abs, tag = 'smem constant byte address 0x4 - core index']
  #allocation1 [shape = 'u32[72,128]{1,0:T(1,128)}', space=vmem, size = 0x9000, scoped, tag = 'internal scratch']
  #allocation2 [shape = 'f32[8,8,128]{2,1,0:T(8,128)}', space=vmem, size = 0x8000, scoped, tag = 'scratch operand']
  %s0 = inlined_call_operand.hbm [shape: f32[8,8,16], index: 0, kind: input, shape index: {}]
  %s1 = inlined_call_operand.hbm [shape: f32[2,16,128], index: 1, kind: input, shape index: {}]
  %s2 = inlined_call_operand.hbm [shape: f32[2,32,128], index: 2, kind: input, shape index: {}]
  %s3 = inlined_call_operand.vmem [shape: f32[2,1,128], index: 3, kind: input, shape index: {}]
  %s4 = inlined_call_operand.hbm [shape: f32[2,2,8,32], index: 4, kind: input, shape index: {}]
  %s5 = inlined_call_operand.hbm [shape: f32[2,8,8,32], index: 5, kind: output, shape index: {0}]
  %s6 = inlined_call_operand.hbm [shape: f32[2,2,8,32], index: 6, kind: output, shape index: {1}]
  %7 = xla_tuple %s5, %s6
  %s8 = sld [smem:[#allocation0]]
  $region77: #{tpu_custom_call.1} parent=0
    _
  %s10 = ssub.s32 1, %s8
  %s11 = scalar_select 0, %s10, %s8
  $region1: #{tpu_custom_call.1} parent=0
    #allocation3 [shape = 'u8[32768]{0}', space=vmem, size = 0x8000, scoped, tag = 'input window, operand 0, single buffered']
    #allocation4 [shape = 's32[2]{0}', space=sflag, size = 0x8, scoped, tag = 'scoped memory for tpu_custom_call.1']
    #allocation5 [shape = 's32[2]{0}', space=sflag, size = 0x8, scoped, tag = 'scoped memory for tpu_custom_call.1']
    #allocation6 [shape = 'u8[16384]{0}', space=vmem, size = 0x4000, scoped, tag = 'input window, operand 1']
    #allocation7 [shape = 's32[2]{0}', space=sflag, size = 0x8, scoped, tag = 'scoped memory for tpu_custom_call.1']
    #allocation8 [shape = 'u8[32768]{0}', space=vmem, size = 0x8000, scoped, tag = 'input window, operand 2']
    #allocation9 [shape = 'u8[16384]{0}', space=vmem, size = 0x4000, scoped, tag = 'input window, operand 4']
    #allocation10 [shape = 's32[2]{0}', space=sflag, size = 0x8, scoped, tag = 'scoped memory for tpu_custom_call.1']
    #allocation11 [shape = 'u8[65536]{0}', space=vmem, size = 0x10000, scoped, tag = 'output window, operand 0']
    #allocation12 [shape = 'u8[16384]{0}', space=vmem, size = 0x4000, scoped, tag = 'output window, operand 1']
    #allocation13 [shape = 's32[2]{0}', space=sflag, size = 0x8, scoped, tag = 'scoped memory for tpu_custom_call.1']
    %12 = vsyncpa [#allocation4], 0
    %13 = vsyncpa [#allocation7], 0
    %s14 = scalar_lea.sflag [#allocation7], 1
    %15 = vsyncpa %s14, 0
    %16 = vsyncpa [#allocation10], 0
    %s17 = scalar_lea.sflag [#allocation10], 1
    %18 = vsyncpa %s17, 0
    %19 = vsyncpa [#allocation5], 0
    %s20 = scalar_lea.sflag [#allocation5], 1
    %21 = vsyncpa %s20, 0
    %22 = vsyncpa [#allocation13], 0
    %s23 = scalar_lea.sflag [#allocation13], 1
    %24 = vsyncpa %s23, 0
    loop: start=0, step=1, limit=4
    $region2: #{tpu_custom_call.1} parent=1 // loop_pre_header
      _
    $region3: #{tpu_custom_call.1} parent=1 // loop_header
      %s26 = sphi 0, %s30
      %p27 = scmp.ge.s32.totalorder %s26, 4
      %s34 = sphi 0, %s34
      %s36 = sphi 0, %s34
      %s37 = sphi 0, %s36
      %s51 = sphi 0, %s37
      %s57 = sphi 0, %s59
      %s60 = sphi 0, %s57
      %s61 = sphi 0, %s60
      %s77 = sphi 0, %s61
      %s83 = sphi 0, %s85
      %s86 = sphi 0, %s83
      %s87 = sphi 0, %s86
      %s103 = sphi 0, %s87
      %s109 = sphi 0, %s111
      %s112 = sphi 0, %s109
      %s113 = sphi 0, %s112
      %s129 = sphi 0, %s113
      %s135 = sphi 0, %s137
      %s138 = sphi 0, %s135
      %s139 = sphi 0, %s138
      %s155 = sphi 0, %s139
      %s161 = sphi 0, %s163
      %s164 = sphi 0, %s161
      %s165 = sphi 0, %s164
      %s181 = sphi 0, %s165
      %s187 = sphi 0, %s189
      %s190 = sphi 0, %s187
      %s191 = sphi 0, %s190
      %s207 = sphi 0, %s191
    $region4: #{tpu_custom_call.1} parent=1 // loop_header_branch
      %29 = sbr.rel (%p27) target = $region8
    $region5: #{tpu_custom_call.1} parent=1 // loop_body
      %s31 = ssub.s32 %s26, 1
      %s32 = ssub.s32 %s26, 2
      %s33 = sadd.s32 %s26, 1
      %s35 = sadd.s32 %s34, 1
      %p38 = scmp.eq.s32.totalorder %s26, 1
      %p39 = scmp.ne.s32.totalorder %s34, %s36
      %p40 = scmp.eq.s32.totalorder %s26, 0
      %p41 = por %p39, %p40
      %p42 = scmp.ne.s32.totalorder %s34, %s36
      %p43 = scmp.eq.s32.totalorder %s31, 1
      %p44 = por %p42, %p43
      %p45 = scmp.ne.s32.totalorder %s36, %s37
      %p46 = scmp.eq.s32.totalorder %s31, 0
      %p47 = por %p45, %p46
      %p48 = scmp.ne.s32.totalorder %s36, %s37
      %p49 = scmp.eq.s32.totalorder %s32, 1
      %p50 = por %p48, %p49
      %p52 = scmp.ne.s32.totalorder %s37, %s51
      %p53 = scmp.eq.s32.totalorder %s32, 0
      %p54 = por %p52, %p53
      %s55 = ssub.s32 %s26, %s33
      %p56 = scmp.eq.s32.totalorder %s55, 0
      %s58 = sadd.s32 %s57, 1
      %s59 = scalar_select %p56, %s57, %s58
      %p62 = pneg %p56
      %p63 = scmp.eq.s32.totalorder %s26, 1
      %p64 = por %p62, %p63
      %p65 = scmp.ne.s32.totalorder %s57, %s60
      %p66 = scmp.eq.s32.totalorder %s26, 0
      %p67 = por %p65, %p66
      %p68 = scmp.ne.s32.totalorder %s57, %s60
      %p69 = scmp.eq.s32.totalorder %s31, 1
      %p70 = por %p68, %p69
      %p71 = scmp.ne.s32.totalorder %s60, %s61
      %p72 = scmp.eq.s32.totalorder %s31, 0
      %p73 = por %p71, %p72
      %p74 = scmp.ne.s32.totalorder %s60, %s61
      %p75 = scmp.eq.s32.totalorder %s32, 1
      %p76 = por %p74, %p75
      %p78 = scmp.ne.s32.totalorder %s61, %s77
      %p79 = scmp.eq.s32.totalorder %s32, 0
      %p80 = por %p78, %p79
      %s81 = ssub.s32 %s26, %s33
      %p82 = scmp.eq.s32.totalorder %s81, 0
      %s84 = sadd.s32 %s83, 1
      %s85 = scalar_select %p82, %s83, %s84
      %p88 = pneg %p82
      %p89 = scmp.eq.s32.totalorder %s26, 1
      %p90 = por %p88, %p89
      %p91 = scmp.ne.s32.totalorder %s83, %s86
      %p92 = scmp.eq.s32.totalorder %s26, 0
      %p93 = por %p91, %p92
      %p94 = scmp.ne.s32.totalorder %s83, %s86
      %p95 = scmp.eq.s32.totalorder %s31, 1
      %p96 = por %p94, %p95
      %p97 = scmp.ne.s32.totalorder %s86, %s87
      %p98 = scmp.eq.s32.totalorder %s31, 0
      %p99 = por %p97, %p98
      %p100 = scmp.ne.s32.totalorder %s86, %s87
      %p101 = scmp.eq.s32.totalorder %s32, 1
      %p102 = por %p100, %p101
      %p104 = scmp.ne.s32.totalorder %s87, %s103
      %p105 = scmp.eq.s32.totalorder %s32, 0
      %p106 = por %p104, %p105
      %s107 = ssub.s32 %s26, %s33
      %p108 = scmp.eq.s32.totalorder %s107, 0
      %s110 = sadd.s32 %s109, 1
      %s111 = scalar_select %p108, %s109, %s110
      %p114 = pneg %p108
      %p115 = scmp.eq.s32.totalorder %s26, 1
      %p116 = por %p114, %p115
      %p117 = scmp.ne.s32.totalorder %s109, %s112
      %p118 = scmp.eq.s32.totalorder %s26, 0
      %p119 = por %p117, %p118
      %p120 = scmp.ne.s32.totalorder %s109, %s112
      %p121 = scmp.eq.s32.totalorder %s31, 1
      %p122 = por %p120, %p121
      %p123 = scmp.ne.s32.totalorder %s112, %s113
      %p124 = scmp.eq.s32.totalorder %s31, 0
      %p125 = por %p123, %p124
      %p126 = scmp.ne.s32.totalorder %s112, %s113
      %p127 = scmp.eq.s32.totalorder %s32, 1
      %p128 = por %p126, %p127
      %p130 = scmp.ne.s32.totalorder %s113, %s129
      %p131 = scmp.eq.s32.totalorder %s32, 0
      %p132 = por %p130, %p131
      %s133 = ssub.s32 %s26, %s33
      %p134 = scmp.eq.s32.totalorder %s133, 0
      %s136 = sadd.s32 %s135, 1
      %s137 = scalar_select %p134, %s135, %s136
      %p140 = pneg %p134
      %p141 = scmp.eq.s32.totalorder %s26, 1
      %p142 = por %p140, %p141
      %p143 = scmp.ne.s32.totalorder %s135, %s138
      %p144 = scmp.eq.s32.totalorder %s26, 0
      %p145 = por %p143, %p144
      %p146 = scmp.ne.s32.totalorder %s135, %s138
      %p147 = scmp.eq.s32.totalorder %s31, 1
      %p148 = por %p146, %p147
      %p149 = scmp.ne.s32.totalorder %s138, %s139
      %p150 = scmp.eq.s32.totalorder %s31, 0
      %p151 = por %p149, %p150
      %p152 = scmp.ne.s32.totalorder %s138, %s139
      %p153 = scmp.eq.s32.totalorder %s32, 1
      %p154 = por %p152, %p153
      %p156 = scmp.ne.s32.totalorder %s139, %s155
      %p157 = scmp.eq.s32.totalorder %s32, 0
      %p158 = por %p156, %p157
      %s159 = ssub.s32 %s26, %s33
      %p160 = scmp.eq.s32.totalorder %s159, 0
      %s162 = sadd.s32 %s161, 1
      %s163 = scalar_select %p160, %s161, %s162
      %p166 = pneg %p160
      %p167 = scmp.eq.s32.totalorder %s26, 1
      %p168 = por %p166, %p167
      %p169 = scmp.ne.s32.totalorder %s161, %s164
      %p170 = scmp.eq.s32.totalorder %s26, 0
      %p171 = por %p169, %p170
      %p172 = scmp.ne.s32.totalorder %s161, %s164
      %p173 = scmp.eq.s32.totalorder %s31, 1
      %p174 = por %p172, %p173
      %p175 = scmp.ne.s32.totalorder %s164, %s165
      %p176 = scmp.eq.s32.totalorder %s31, 0
      %p177 = por %p175, %p176
      %p178 = scmp.ne.s32.totalorder %s164, %s165
      %p179 = scmp.eq.s32.totalorder %s32, 1
      %p180 = por %p178, %p179
      %p182 = scmp.ne.s32.totalorder %s165, %s181
      %p183 = scmp.eq.s32.totalorder %s32, 0
      %p184 = por %p182, %p183
      %s185 = ssub.s32 %s26, %s33
      %p186 = scmp.eq.s32.totalorder %s185, 0
      %s188 = sadd.s32 %s187, 1
      %s189 = scalar_select %p186, %s187, %s188
      %p192 = pneg %p186
      %p193 = scmp.eq.s32.totalorder %s26, 1
      %p194 = por %p192, %p193
      %p195 = scmp.ne.s32.totalorder %s187, %s190
      %p196 = scmp.eq.s32.totalorder %s26, 0
      %p197 = por %p195, %p196
      %p198 = scmp.ne.s32.totalorder %s187, %s190
      %p199 = scmp.eq.s32.totalorder %s31, 1
      %p200 = por %p198, %p199
      %p201 = scmp.ne.s32.totalorder %s190, %s191
      %p202 = scmp.eq.s32.totalorder %s31, 0
      %p203 = por %p201, %p202
      %p204 = scmp.ne.s32.totalorder %s190, %s191
      %p205 = scmp.eq.s32.totalorder %s32, 1
      %p206 = por %p204, %p205
      %p208 = scmp.ne.s32.totalorder %s191, %s207
      %p209 = scmp.eq.s32.totalorder %s32, 0
      %p210 = por %p208, %p209
      %p211 = scmp.le.s32.totalorder 1, %s26
      %p212 = scmp.lt.s32.totalorder %s26, 3
      %p213 = pnand %p211, %p212
      %p214 = pneg %p213
      // Predicated region
      $region9: #{tpu_custom_call.1} parent=5 // pred_check
        _
      $region10: #{tpu_custom_call.1} parent=5 // pred_check_branch
        %216 = sbr.rel (%p213) target = $region12
      $region11: #{tpu_custom_call.1} parent=5 // pred_region
        %s217 = ssub.s32 %s26, 1
        // Predicated region
        $region13: #{tpu_custom_call.1} parent=11 // pred_check
          %p218 = pneg %p47
        $region14: #{tpu_custom_call.1} parent=11 // pred_check_branch
          %220 = sbr.rel (%p218) target = $region16
        $region15: #{tpu_custom_call.1} parent=11 // pred_region
          %222 = vsyncadd [#allocation4], 0
          %s223 = sshll.u32 %s0, 4
          %s224 = int_to_ptr.hbm [resolvable:$true] %s223
          %s225 = sshll.u32 [#allocation3], 4
          %s226 = int_to_ptr.vmem [resolvable:$true] %s225
          %231 = dma.hbm_to_vmem [thread:$0]  %s224, 1024, %s226, [#allocation4], 128, 128, 8
        $region16: #{tpu_custom_call.1} parent=11 // pred_fallthru
          _
      $region12: #{tpu_custom_call.1} parent=5 // pred_fallthru
        _
      %p232 = scmp.lt.s32.totalorder %s26, 2
      // Predicated region
      $region17: #{tpu_custom_call.1} parent=5 // pred_check
        %p233 = pneg %p232
      $region18: #{tpu_custom_call.1} parent=5 // pred_check_branch
        %235 = sbr.rel (%p233) target = $region20
      $region19: #{tpu_custom_call.1} parent=5 // pred_region
        // Predicated region
        $region21: #{tpu_custom_call.1} parent=19 // pred_check
          %p236 = pneg %p67
        $region22: #{tpu_custom_call.1} parent=19 // pred_check_branch
          %238 = sbr.rel (%p236) target = $region24
        $region23: #{tpu_custom_call.1} parent=19 // pred_region
          %s239 = sand.u32 %s26, 1
          %s240 = scalar_lea.sflag [#allocation7], %s239
          %s241 = sand.u32 %s57, 1
          %s242 = smul.addr %s241, 16
          %s243 = scalar_lea.vmem [#allocation6], %s242
          %245 = vsyncadd %s240, 0
          %s246 = smul.addr %s26, 2
          %s247 = smul.addr %s246, 8
          %s248 = scalar_lea.hbm %s1, %s247
          %s249 = sshll.u32 %s248, 4
          %s250 = int_to_ptr.hbm [resolvable:$true] %s249
          %s251 = sshll.u32 %s243, 4
          %s252 = int_to_ptr.vmem [resolvable:$true] %s251
          %257 = dma.hbm_to_vmem [thread:$0]  %s250, 256, %s252, %s240, 128, 128, 8
        $region24: #{tpu_custom_call.1} parent=19 // pred_fallthru
          _
        // Predicated region
        $region25: #{tpu_custom_call.1} parent=19 // pred_check
          %p258 = pneg %p93
        $region26: #{tpu_custom_call.1} parent=19 // pred_check_branch
          %260 = sbr.rel (%p258) target = $region28
        $region27: #{tpu_custom_call.1} parent=19 // pred_region
          %s261 = sand.u32 %s26, 1
          %s262 = scalar_lea.sflag [#allocation7], %s261
          %s263 = sand.u32 %s83, 1
          %s264 = smul.addr %s263, 32
          %s265 = scalar_lea.vmem [#allocation8], %s264
          %267 = vsyncadd %s262, 0
          %s268 = smul.addr %s26, 4
          %s269 = smul.addr %s268, 8
          %s270 = scalar_lea.hbm %s2, %s269
          %s271 = sshll.u32 %s270, 4
          %s272 = int_to_ptr.hbm [resolvable:$true] %s271
          %s273 = sshll.u32 %s265, 4
          %s274 = int_to_ptr.vmem [resolvable:$true] %s273
          %279 = dma.hbm_to_vmem [thread:$0]  %s272, 512, %s274, %s262, 128, 128, 8
        $region28: #{tpu_custom_call.1} parent=19 // pred_fallthru
          _
        // Predicated region
        $region29: #{tpu_custom_call.1} parent=19 // pred_check
          %p280 = pneg %p119
        $region30: #{tpu_custom_call.1} parent=19 // pred_check_branch
          %282 = sbr.rel (%p280) target = $region32
        $region31: #{tpu_custom_call.1} parent=19 // pred_region
          %p283 = scmp.lt.s32.totalorder %s26, 1
          %s284 = scalar_select %p283, %s26, 1
          %s285 = scalar_lea.vmem %s3, %s284
        $region32: #{tpu_custom_call.1} parent=19 // pred_fallthru
          _
        // Predicated region
        $region33: #{tpu_custom_call.1} parent=19 // pred_check
          %p286 = pneg %p145
        $region34: #{tpu_custom_call.1} parent=19 // pred_check_branch
          %288 = sbr.rel (%p286) target = $region36
        $region35: #{tpu_custom_call.1} parent=19 // pred_region
          %s289 = sand.u32 %s135, 1
          %s290 = scalar_lea.sflag [#allocation10], %s289
          %s291 = sand.u32 %s135, 1
          %s292 = smul.addr %s291, 16
          %s293 = scalar_lea.vmem [#allocation9], %s292
          %295 = vsyncadd %s290, 0
          %s296 = smul.addr %s26, 2
          %s297 = smul.addr %s296, 8
          %s298 = scalar_lea.hbm %s4, %s297
          %s299 = sshll.u32 %s298, 4
          %s300 = int_to_ptr.hbm [resolvable:$true] %s299
          %s301 = sshll.u32 %s293, 4
          %s302 = int_to_ptr.vmem [resolvable:$true] %s301
          %307 = dma.hbm_to_vmem [thread:$0]  %s300, 256, %s302, %s290, 128, 128, 8
        $region36: #{tpu_custom_call.1} parent=19 // pred_fallthru
          _
      $region20: #{tpu_custom_call.1} parent=5 // pred_fallthru
        _
      %p308 = scmp.le.s32.totalorder 1, %s26
      %p309 = scmp.lt.s32.totalorder %s26, 3
      %p310 = pnand %p308, %p309
      %p311 = pneg %p310
      // Predicated region
      $region37: #{tpu_custom_call.1} parent=5 // pred_check
        _
      $region38: #{tpu_custom_call.1} parent=5 // pred_check_branch
        %313 = sbr.rel (%p310) target = $region40
      $region39: #{tpu_custom_call.1} parent=5 // pred_region
        %s314 = ssub.s32 %s26, 1
        // Predicated region
        $region41: #{tpu_custom_call.1} parent=39 // pred_check
          %p315 = pneg %p47
        $region42: #{tpu_custom_call.1} parent=39 // pred_check_branch
          %317 = sbr.rel (%p315) target = $region44
        $region43: #{tpu_custom_call.1} parent=39 // pred_region
          %319 = dma.done [#allocation4], 1024
        $region44: #{tpu_custom_call.1} parent=39 // pred_fallthru
          _
        %s320 = sand.u32 %s31, 1
        %s321 = scalar_lea.sflag [#allocation7], %s320
        %s322 = sand.u32 %s60, 1
        %s323 = smul.addr %s322, 16
        %s324 = scalar_lea.vmem [#allocation6], %s323
        // Predicated region
        $region45: #{tpu_custom_call.1} parent=39 // pred_check
          %p325 = pneg %p73
        $region46: #{tpu_custom_call.1} parent=39 // pred_check_branch
          %327 = sbr.rel (%p325) target = $region48
        $region47: #{tpu_custom_call.1} parent=39 // pred_region
          %329 = dma.done %s321, 256
        $region48: #{tpu_custom_call.1} parent=39 // pred_fallthru
          _
        %s330 = sand.u32 %s31, 1
        %s331 = scalar_lea.sflag [#allocation7], %s330
        %s332 = sand.u32 %s86, 1
        %s333 = smul.addr %s332, 32
        %s334 = scalar_lea.vmem [#allocation8], %s333
        // Predicated region
        $region49: #{tpu_custom_call.1} parent=39 // pred_check
          %p335 = pneg %p99
        $region50: #{tpu_custom_call.1} parent=39 // pred_check_branch
          %337 = sbr.rel (%p335) target = $region52
        $region51: #{tpu_custom_call.1} parent=39 // pred_region
          %339 = dma.done %s331, 512
        $region52: #{tpu_custom_call.1} parent=39 // pred_fallthru
          _
        %s340 = sand.u32 %s138, 1
        %s341 = scalar_lea.sflag [#allocation10], %s340
        %s342 = sand.u32 %s138, 1
        %s343 = smul.addr %s342, 16
        %s344 = scalar_lea.vmem [#allocation9], %s343
        // Predicated region
        $region53: #{tpu_custom_call.1} parent=39 // pred_check
          %p345 = pneg %p151
        $region54: #{tpu_custom_call.1} parent=39 // pred_check_branch
          %347 = sbr.rel (%p345) target = $region56
        $region55: #{tpu_custom_call.1} parent=39 // pred_region
          %349 = dma.done %s341, 256
        $region56: #{tpu_custom_call.1} parent=39 // pred_fallthru
          _
        %p350 = pneg %p47
        %p351 = pneg %p44
        %s352 = sand.u32 %s31, 1
        %s353 = scalar_lea.sflag [#allocation7], %s352
        %s354 = sand.u32 %s60, 1
        %s355 = smul.addr %s354, 16
        %s356 = scalar_lea.vmem [#allocation6], %s355
        %p357 = pneg %p73
        %p358 = pneg %p70
        %s359 = sand.u32 %s31, 1
        %s360 = scalar_lea.sflag [#allocation7], %s359
        %s361 = sand.u32 %s86, 1
        %s362 = smul.addr %s361, 32
        %s363 = scalar_lea.vmem [#allocation8], %s362
        %p364 = pneg %p99
        %p365 = pneg %p96
        %p366 = scmp.lt.s32.totalorder %s31, 1
        %s367 = scalar_select %p366, %s31, 1
        %s368 = scalar_lea.vmem %s3, %s367
        %p369 = pneg %p125
        %p370 = pneg %p122
        %s371 = sand.u32 %s138, 1
        %s372 = scalar_lea.sflag [#allocation10], %s371
        %s373 = sand.u32 %s138, 1
        %s374 = smul.addr %s373, 16
        %s375 = scalar_lea.vmem [#allocation9], %s374
        %p376 = pneg %p151
        %p377 = pneg %p148
        %p378 = pneg %p177
        %p379 = pneg %p174
        %s380 = sand.u32 %s164, 1
        %s381 = scalar_lea.sflag [#allocation5], %s380
        %s382 = sand.u32 %s164, 1
        %s383 = smul.addr %s382, 64
        %s384 = scalar_lea.vmem [#allocation11], %s383
        %p385 = pneg %p203
        %p386 = pneg %p200
        %s387 = sand.u32 %s190, 1
        %s388 = scalar_lea.sflag [#allocation13], %s387
        %s389 = sand.u32 %s190, 1
        %s390 = smul.addr %s389, 16
        %s391 = scalar_lea.vmem [#allocation12], %s390
        %p392 = scmp.lt.s32.totalorder %s31, 1
        %s393 = scalar_select %p392, %s31, 1
        %s394 = scalar_lea.vmem %s3, %s393
        %v395 = vld [vmem:[#allocation3] sm:$0xff]
        %v396 = vld [vmem:[#allocation3 + $0x8] sm:$0xff]
        %v397 = vld [vmem:[#allocation3 + $0x10] sm:$0xff]
        %v398 = vld [vmem:[#allocation3 + $0x18] sm:$0xff]
        %v399 = vld [vmem:[#allocation3 + $0x20] sm:$0xff]
        %v400 = vld [vmem:[#allocation3 + $0x28] sm:$0xff]
        %v401 = vld [vmem:[#allocation3 + $0x30] sm:$0xff]
        %v402 = vld [vmem:[#allocation3 + $0x38] sm:$0xff]
        %v403 = vld [vmem:[%s324] sm:$0xff]
        %v404 = vld [vmem:[%s324 + $0x8] sm:$0xff]
        %v405 = vld [vmem:[%s394] sm:$0x1]
        %v407 = vperm.slane %v405, 0
        %vm409 = vcmask 130048
        %v411 = vsel %vm409, %v395, 0
        %v414 = vsel %vm409, %v396, 0
        %v417 = vsel %vm409, %v397, 0
        %v420 = vsel %vm409, %v398, 0
        %v423 = vsel %vm409, %v399, 0
        %v426 = vsel %vm409, %v400, 0
        %v429 = vsel %vm409, %v401, 0
        %v432 = vsel %vm409, %v402, 0
        %434 = vmatpush.msra.mxu0 0.0
        %435 = vmatpush.msra.mxu0 0.0
        %436 = vmatpush.msra.mxu0 0.0
        %437 = vmatpush.msra.mxu0 0.0
        %438 = vmatpush.msra.mxu0 0.0
        %439 = vmatpush.msra.mxu0 0.0
        %440 = vmatpush.msra.mxu0 0.0
        %441 = vmatpush.msra.mxu0 0.0
        %442 = vmatpush.msra.mxu0 0.0
        %443 = vmatpush.msra.mxu0 0.0
        %444 = vmatpush.msra.mxu0 0.0
        %445 = vmatpush.msra.mxu0 0.0
        %446 = vmatpush.msra.mxu0 0.0
        %447 = vmatpush.msra.mxu0 0.0
        %448 = vmatpush.msra.mxu0 %v404
        %449 = vmatpush.msra.mxu0 %v403
        %450 = vmatmul.f32.gmra.mxu0 %v411
        %v451 = vpop.f32.mrf.mxu0
        %v452 = vadd.f32 %v407, %v451
        %453 = vmatmul.f32.gmra.mxu0 %v414
        %v454 = vpop.f32.mrf.mxu0
        %v455 = vadd.f32 %v407, %v454
        %456 = vmatmul.f32.gmra.mxu0 %v417
        %v457 = vpop.f32.mrf.mxu0
        %v458 = vadd.f32 %v407, %v457
        %459 = vmatmul.f32.gmra.mxu0 %v420
        %v460 = vpop.f32.mrf.mxu0
        %v461 = vadd.f32 %v407, %v460
        %462 = vmatmul.f32.gmra.mxu0 %v423
        %v463 = vpop.f32.mrf.mxu0
        %v464 = vadd.f32 %v407, %v463
        %465 = vmatmul.f32.gmra.mxu0 %v426
        %v466 = vpop.f32.mrf.mxu0
        %v467 = vadd.f32 %v407, %v466
        %468 = vmatmul.f32.gmra.mxu0 %v429
        %v469 = vpop.f32.mrf.mxu0
        %v470 = vadd.f32 %v407, %v469
        %471 = vmatmul.f32.gmra.mxu0 %v432
        %v472 = vpop.f32.mrf.mxu0
        %v473 = vadd.f32 %v407, %v472
        %474 = vdwg.mxu0
        %475 = vst [vmem:[#allocation2] sm:$0xff] %v452
        %476 = vst [vmem:[#allocation2 + $0x8] sm:$0xff] %v455
        %477 = vst [vmem:[#allocation2 + $0x10] sm:$0xff] %v458
        %478 = vst [vmem:[#allocation2 + $0x18] sm:$0xff] %v461
        %479 = vst [vmem:[#allocation2 + $0x20] sm:$0xff] %v464
        %480 = vst [vmem:[#allocation2 + $0x28] sm:$0xff] %v467
        %481 = vst [vmem:[#allocation2 + $0x30] sm:$0xff] %v470
        %482 = vst [vmem:[#allocation2 + $0x38] sm:$0xff] %v473
        %v483 = vld [vmem:[%s334] sm:$0xff]
        %v484 = vld [vmem:[%s334 + $0x8] sm:$0xff]
        %v485 = vld [vmem:[%s334 + $0x10] sm:$0xff]
        %v486 = vld [vmem:[%s334 + $0x18] sm:$0xff]
        %v487 = vld [vmem:[%s344] sm:$0xff]
        %s488 = scalar_lea.vmem %s344, 8 [#allocation9]
        %v489 = vld [vmem:[%s488] sm:$0xff]
        %p490 = scmp.eq.s32.totalorder %s31, 0
        %s491 = scalar_select %p490, 0, 7
        %s492 = smul.u32 %s491, 8
        %s493 = scalar_lea.vmem [#allocation2], %s492
        %v494 = vld [vmem:[%s493] sm:$0xff]
        %vm495 = vcmask 261120
        %v497 = vsel %vm495, %v487, 0
        %499 = vmatpush.msra.mxu0 0.0
        %500 = vmatpush.msra.mxu0 0.0
        %501 = vmatpush.msra.mxu0 0.0
        %502 = vmatpush.msra.mxu0 0.0
        %503 = vmatpush.msra.mxu0 0.0
        %504 = vmatpush.msra.mxu0 0.0
        %505 = vmatpush.msra.mxu0 0.0
        %506 = vmatpush.msra.mxu0 0.0
        %507 = vmatpush.msra.mxu0 0.0
        %508 = vmatpush.msra.mxu0 0.0
        %509 = vmatpush.msra.mxu0 0.0
        %510 = vmatpush.msra.mxu0 0.0
        %511 = vmatpush.msra.mxu0 %v486
        %512 = vmatpush.msra.mxu0 %v485
        %513 = vmatpush.msra.mxu0 %v484
        %514 = vmatpush.msra.mxu0 %v483
        %515 = vmatmul.f32.gmra.mxu0 %v497
        %v516 = vpop.f32.mrf.mxu0
        %v517 = vadd.f32 0.0, %v516
        %518 = vdwg.mxu0
        %v519 = vadd.f32 %v494, %v517
        %v520 = vxor.u32 %v519, 2147483648
        %v521 = vmul.f32 %v520, 1.442695
        %v522 = vpow.pop %v521
        %v523 = vadd.f32 %v522, 1.0
        %v524 = vrcp.pop %v523
        %v525 = vmul.f32 %v523, %v524
        %v526 = vsub.f32 1.0, %v525
        %v527 = vmul.f32 %v524, %v526
        %v528 = vadd.f32 %v524, %v527
        %vm529 = vweird.f32 %v523
        %vm530 = vweird.f32 %v524
        %vm531 = vmor %vm529, %vm530
        %v532 = vsel %vm531, %v524, %v528
        %v533 = vand.u32 2147483647, %v523
        %vm534 = vcmp.eq.f32.partialorder %v533, 8.507059e+37
        %v535 = vand.u32 %v523, 2147483648
        %v536 = vor.u32 1.1754944e-38, %v535
        %v537 = vsel %vm534, %v536, %v532
        %v538 = vmul.f32 1.0, %v537
        %v539 = vtanh.pop %v519
        %541 = vrot.lane.b32.xlu0 %v489, 32
        %v542 = vpop.permute.xlu0 %541
        %v544 = vmul.f32 %v538, %v542
        %546 = vrot.lane.b32.xlu0 %v539, 64
        %v547 = vpop.permute.xlu0 %546
        %v549 = vmul.f32 %v538, %v547
        %551 = vrot.lane.b32.xlu0 %v549, 32
        %v552 = vpop.permute.xlu0 %551
        %v554 = vadd.f32 %v544, %v552
        %v555 = vtanh.pop %v554
        %557 = vrot.lane.b32.xlu0 %v555, 64
        %v558 = vpop.permute.xlu0 %557
        %v560 = vmul.f32 %v538, %v558
        %562 = vrot.lane.b32.xlu0 %v560, 32
        %v563 = vpop.permute.xlu0 %562
        %s565 = scalar_lea.vmem %s384, %s492 [#allocation11]
        %566 = vst.msk [vmem:[%s565] sm:$0xff] %vm495, %v563
        %s567 = scalar_select %p490, 1, 6
        %s568 = smul.u32 %s567, 8
        %s569 = scalar_lea.vmem [#allocation2], %s568
        %v570 = vld [vmem:[%s569] sm:$0xff]
        %v571 = vsel %vm495, %v563, 0
        %573 = vmatpush.msra.mxu0 0.0
        %574 = vmatpush.msra.mxu0 0.0
        %575 = vmatpush.msra.mxu0 0.0
        %576 = vmatpush.msra.mxu0 0.0
        %577 = vmatpush.msra.mxu0 0.0
        %578 = vmatpush.msra.mxu0 0.0
        %579 = vmatpush.msra.mxu0 0.0
        %580 = vmatpush.msra.mxu0 0.0
        %581 = vmatpush.msra.mxu0 0.0
        %582 = vmatpush.msra.mxu0 0.0
        %583 = vmatpush.msra.mxu0 0.0
        %584 = vmatpush.msra.mxu0 0.0
        %585 = vmatpush.msra.mxu0 %v486
        %586 = vmatpush.msra.mxu0 %v485
        %587 = vmatpush.msra.mxu0 %v484
        %588 = vmatpush.msra.mxu0 %v483
        %589 = vmatmul.f32.gmra.mxu0 %v571
        %v590 = vpop.f32.mrf.mxu0
        %v591 = vadd.f32 0.0, %v590
        %592 = vdwg.mxu0
        %v593 = vadd.f32 %v570, %v591
        %v594 = vxor.u32 %v593, 2147483648
        %v595 = vmul.f32 %v594, 1.442695
        %v596 = vpow.pop %v595
        %v597 = vadd.f32 %v596, 1.0
        %v598 = vrcp.pop %v597
        %v599 = vmul.f32 %v597, %v598
        %v600 = vsub.f32 1.0, %v599
        %v601 = vmul.f32 %v598, %v600
        %v602 = vadd.f32 %v598, %v601
        %vm603 = vweird.f32 %v597
        %vm604 = vweird.f32 %v598
        %vm605 = vmor %vm603, %vm604
        %v606 = vsel %vm605, %v598, %v602
        %v607 = vand.u32 2147483647, %v597
        %vm608 = vcmp.eq.f32.partialorder %v607, 8.507059e+37
        %v609 = vand.u32 %v597, 2147483648
        %v610 = vor.u32 1.1754944e-38, %v609
        %v611 = vsel %vm608, %v610, %v606
        %v612 = vmul.f32 1.0, %v611
        %v613 = vtanh.pop %v593
        %v614 = vmul.f32 %v612, %v554
        %616 = vrot.lane.b32.xlu0 %v613, 64
        %v617 = vpop.permute.xlu0 %616
        %v619 = vmul.f32 %v612, %v617
        %621 = vrot.lane.b32.xlu0 %v619, 32
        %v622 = vpop.permute.xlu0 %621
        %v624 = vadd.f32 %v614, %v622
        %v625 = vtanh.pop %v624
        %627 = vrot.lane.b32.xlu0 %v625, 64
        %v628 = vpop.permute.xlu0 %627
        %v630 = vmul.f32 %v612, %v628
        %632 = vrot.lane.b32.xlu0 %v630, 32
        %v633 = vpop.permute.xlu0 %632
        %s635 = scalar_lea.vmem %s384, %s568 [#allocation11]
        %636 = vst.msk [vmem:[%s635] sm:$0xff] %vm495, %v633
        %s637 = scalar_select %p490, 2, 5
        %s638 = smul.u32 %s637, 8
        %s639 = scalar_lea.vmem [#allocation2], %s638
        %v640 = vld [vmem:[%s639] sm:$0xff]
        %v641 = vsel %vm495, %v633, 0
        %643 = vmatpush.msra.mxu0 0.0
        %644 = vmatpush.msra.mxu0 0.0
        %645 = vmatpush.msra.mxu0 0.0
        %646 = vmatpush.msra.mxu0 0.0
        %647 = vmatpush.msra.mxu0 0.0
        %648 = vmatpush.msra.mxu0 0.0
        %649 = vmatpush.msra.mxu0 0.0
        %650 = vmatpush.msra.mxu0 0.0
        %651 = vmatpush.msra.mxu0 0.0
        %652 = vmatpush.msra.mxu0 0.0
        %653 = vmatpush.msra.mxu0 0.0
        %654 = vmatpush.msra.mxu0 0.0
        %655 = vmatpush.msra.mxu0 %v486
        %656 = vmatpush.msra.mxu0 %v485
        %657 = vmatpush.msra.mxu0 %v484
        %658 = vmatpush.msra.mxu0 %v483
        %659 = vmatmul.f32.gmra.mxu0 %v641
        %v660 = vpop.f32.mrf.mxu0
        %v661 = vadd.f32 0.0, %v660
        %662 = vdwg.mxu0
        %v663 = vadd.f32 %v640, %v661
        %v664 = vxor.u32 %v663, 2147483648
        %v665 = vmul.f32 %v664, 1.442695
        %v666 = vpow.pop %v665
        %v667 = vadd.f32 %v666, 1.0
        %v668 = vrcp.pop %v667
        %v669 = vmul.f32 %v667, %v668
        %v670 = vsub.f32 1.0, %v669
        %v671 = vmul.f32 %v668, %v670
        %v672 = vadd.f32 %v668, %v671
        %vm673 = vweird.f32 %v667
        %vm674 = vweird.f32 %v668
        %vm675 = vmor %vm673, %vm674
        %v676 = vsel %vm675, %v668, %v672
        %v677 = vand.u32 2147483647, %v667
        %vm678 = vcmp.eq.f32.partialorder %v677, 8.507059e+37
        %v679 = vand.u32 %v667, 2147483648
        %v680 = vor.u32 1.1754944e-38, %v679
        %v681 = vsel %vm678, %v680, %v676
        %v682 = vmul.f32 1.0, %v681
        %v683 = vtanh.pop %v663
        %v684 = vmul.f32 %v682, %v624
        %686 = vrot.lane.b32.xlu0 %v683, 64
        %v687 = vpop.permute.xlu0 %686
        %v689 = vmul.f32 %v682, %v687
        %691 = vrot.lane.b32.xlu0 %v689, 32
        %v692 = vpop.permute.xlu0 %691
        %v694 = vadd.f32 %v684, %v692
        %v695 = vtanh.pop %v694
        %697 = vrot.lane.b32.xlu0 %v695, 64
        %v698 = vpop.permute.xlu0 %697
        %v700 = vmul.f32 %v682, %v698
        %702 = vrot.lane.b32.xlu0 %v700, 32
        %v703 = vpop.permute.xlu0 %702
        %s705 = scalar_lea.vmem %s384, %s638 [#allocation11]
        %706 = vst.msk [vmem:[%s705] sm:$0xff] %vm495, %v703
        %s707 = scalar_select %p490, 3, 4
        %s708 = smul.u32 %s707, 8
        %s709 = scalar_lea.vmem [#allocation2], %s708
        %v710 = vld [vmem:[%s709] sm:$0xff]
        %v711 = vsel %vm495, %v703, 0
        %713 = vmatpush.msra.mxu0 0.0
        %714 = vmatpush.msra.mxu0 0.0
        %715 = vmatpush.msra.mxu0 0.0
        %716 = vmatpush.msra.mxu0 0.0
        %717 = vmatpush.msra.mxu0 0.0
        %718 = vmatpush.msra.mxu0 0.0
        %719 = vmatpush.msra.mxu0 0.0
        %720 = vmatpush.msra.mxu0 0.0
        %721 = vmatpush.msra.mxu0 0.0
        %722 = vmatpush.msra.mxu0 0.0
        %723 = vmatpush.msra.mxu0 0.0
        %724 = vmatpush.msra.mxu0 0.0
        %725 = vmatpush.msra.mxu0 %v486
        %726 = vmatpush.msra.mxu0 %v485
        %727 = vmatpush.msra.mxu0 %v484
        %728 = vmatpush.msra.mxu0 %v483
        %729 = vmatmul.f32.gmra.mxu0 %v711
        %v730 = vpop.f32.mrf.mxu0
        %v731 = vadd.f32 0.0, %v730
        %732 = vdwg.mxu0
        %v733 = vadd.f32 %v710, %v731
        %v734 = vxor.u32 %v733, 2147483648
        %v735 = vmul.f32 %v734, 1.442695
        %v736 = vpow.pop %v735
        %v737 = vadd.f32 %v736, 1.0
        %v738 = vrcp.pop %v737
        %v739 = vmul.f32 %v737, %v738
        %v740 = vsub.f32 1.0, %v739
        %v741 = vmul.f32 %v738, %v740
        %v742 = vadd.f32 %v738, %v741
        %vm743 = vweird.f32 %v737
        %vm744 = vweird.f32 %v738
        %vm745 = vmor %vm743, %vm744
        %v746 = vsel %vm745, %v738, %v742
        %v747 = vand.u32 2147483647, %v737
        %vm748 = vcmp.eq.f32.partialorder %v747, 8.507059e+37
        %v749 = vand.u32 %v737, 2147483648
        %v750 = vor.u32 1.1754944e-38, %v749
        %v751 = vsel %vm748, %v750, %v746
        %v752 = vmul.f32 1.0, %v751
        %v753 = vtanh.pop %v733
        %v754 = vmul.f32 %v752, %v694
        %756 = vrot.lane.b32.xlu0 %v753, 64
        %v757 = vpop.permute.xlu0 %756
        %v759 = vmul.f32 %v752, %v757
        %761 = vrot.lane.b32.xlu0 %v759, 32
        %v762 = vpop.permute.xlu0 %761
        %v764 = vadd.f32 %v754, %v762
        %v765 = vtanh.pop %v764
        %767 = vrot.lane.b32.xlu0 %v765, 64
        %v768 = vpop.permute.xlu0 %767
        %v770 = vmul.f32 %v752, %v768
        %772 = vrot.lane.b32.xlu0 %v770, 32
        %v773 = vpop.permute.xlu0 %772
        %s775 = scalar_lea.vmem %s384, %s708 [#allocation11]
        %776 = vst.msk [vmem:[%s775] sm:$0xff] %vm495, %v773
        %s777 = scalar_select %p490, 4, 3
        %s778 = smul.u32 %s777, 8
        %s779 = scalar_lea.vmem [#allocation2], %s778
        %v780 = vld [vmem:[%s779] sm:$0xff]
        %v781 = vsel %vm495, %v773, 0
        %783 = vmatpush.msra.mxu0 0.0
        %784 = vmatpush.msra.mxu0 0.0
        %785 = vmatpush.msra.mxu0 0.0
        %786 = vmatpush.msra.mxu0 0.0
        %787 = vmatpush.msra.mxu0 0.0
        %788 = vmatpush.msra.mxu0 0.0
        %789 = vmatpush.msra.mxu0 0.0
        %790 = vmatpush.msra.mxu0 0.0
        %791 = vmatpush.msra.mxu0 0.0
        %792 = vmatpush.msra.mxu0 0.0
        %793 = vmatpush.msra.mxu0 0.0
        %794 = vmatpush.msra.mxu0 0.0
        %795 = vmatpush.msra.mxu0 %v486
        %796 = vmatpush.msra.mxu0 %v485
        %797 = vmatpush.msra.mxu0 %v484
        %798 = vmatpush.msra.mxu0 %v483
        %799 = vmatmul.f32.gmra.mxu0 %v781
        %v800 = vpop.f32.mrf.mxu0
        %v801 = vadd.f32 0.0, %v800
        %802 = vdwg.mxu0
        %v803 = vadd.f32 %v780, %v801
        %v804 = vxor.u32 %v803, 2147483648
        %v805 = vmul.f32 %v804, 1.442695
        %v806 = vpow.pop %v805
        %v807 = vadd.f32 %v806, 1.0
        %v808 = vrcp.pop %v807
        %v809 = vmul.f32 %v807, %v808
        %v810 = vsub.f32 1.0, %v809
        %v811 = vmul.f32 %v808, %v810
        %v812 = vadd.f32 %v808, %v811
        %vm813 = vweird.f32 %v807
        %vm814 = vweird.f32 %v808
        %vm815 = vmor %vm813, %vm814
        %v816 = vsel %vm815, %v808, %v812
        %v817 = vand.u32 2147483647, %v807
        %vm818 = vcmp.eq.f32.partialorder %v817, 8.507059e+37
        %v819 = vand.u32 %v807, 2147483648
        %v820 = vor.u32 1.1754944e-38, %v819
        %v821 = vsel %vm818, %v820, %v816
        %v822 = vmul.f32 1.0, %v821
        %v823 = vtanh.pop %v803
        %v824 = vmul.f32 %v822, %v764
        %826 = vrot.lane.b32.xlu0 %v823, 64
        %v827 = vpop.permute.xlu0 %826
        %v829 = vmul.f32 %v822, %v827
        %831 = vrot.lane.b32.xlu0 %v829, 32
        %v832 = vpop.permute.xlu0 %831
        %v834 = vadd.f32 %v824, %v832
        %v835 = vtanh.pop %v834
        %837 = vrot.lane.b32.xlu0 %v835, 64
        %v838 = vpop.permute.xlu0 %837
        %v840 = vmul.f32 %v822, %v838
        %842 = vrot.lane.b32.xlu0 %v840, 32
        %v843 = vpop.permute.xlu0 %842
        %s845 = scalar_lea.vmem %s384, %s778 [#allocation11]
        %846 = vst.msk [vmem:[%s845] sm:$0xff] %vm495, %v843
        %s847 = scalar_select %p490, 5, 2
        %s848 = smul.u32 %s847, 8
        %s849 = scalar_lea.vmem [#allocation2], %s848
        %v850 = vld [vmem:[%s849] sm:$0xff]
        %v851 = vsel %vm495, %v843, 0
        %853 = vmatpush.msra.mxu0 0.0
        %854 = vmatpush.msra.mxu0 0.0
        %855 = vmatpush.msra.mxu0 0.0
        %856 = vmatpush.msra.mxu0 0.0
        %857 = vmatpush.msra.mxu0 0.0
        %858 = vmatpush.msra.mxu0 0.0
        %859 = vmatpush.msra.mxu0 0.0
        %860 = vmatpush.msra.mxu0 0.0
        %861 = vmatpush.msra.mxu0 0.0
        %862 = vmatpush.msra.mxu0 0.0
        %863 = vmatpush.msra.mxu0 0.0
        %864 = vmatpush.msra.mxu0 0.0
        %865 = vmatpush.msra.mxu0 %v486
        %866 = vmatpush.msra.mxu0 %v485
        %867 = vmatpush.msra.mxu0 %v484
        %868 = vmatpush.msra.mxu0 %v483
        %869 = vmatmul.f32.gmra.mxu0 %v851
        %v870 = vpop.f32.mrf.mxu0
        %v871 = vadd.f32 0.0, %v870
        %872 = vdwg.mxu0
        %v873 = vadd.f32 %v850, %v871
        %v874 = vxor.u32 %v873, 2147483648
        %v875 = vmul.f32 %v874, 1.442695
        %v876 = vpow.pop %v875
        %v877 = vadd.f32 %v876, 1.0
        %v878 = vrcp.pop %v877
        %v879 = vmul.f32 %v877, %v878
        %v880 = vsub.f32 1.0, %v879
        %v881 = vmul.f32 %v878, %v880
        %v882 = vadd.f32 %v878, %v881
        %vm883 = vweird.f32 %v877
        %vm884 = vweird.f32 %v878
        %vm885 = vmor %vm883, %vm884
        %v886 = vsel %vm885, %v878, %v882
        %v887 = vand.u32 2147483647, %v877
        %vm888 = vcmp.eq.f32.partialorder %v887, 8.507059e+37
        %v889 = vand.u32 %v877, 2147483648
        %v890 = vor.u32 1.1754944e-38, %v889
        %v891 = vsel %vm888, %v890, %v886
        %v892 = vmul.f32 1.0, %v891
        %v893 = vtanh.pop %v873
        %v894 = vmul.f32 %v892, %v834
        %896 = vrot.lane.b32.xlu0 %v893, 64
        %v897 = vpop.permute.xlu0 %896
        %v899 = vmul.f32 %v892, %v897
        %901 = vrot.lane.b32.xlu0 %v899, 32
        %v902 = vpop.permute.xlu0 %901
        %v904 = vadd.f32 %v894, %v902
        %v905 = vtanh.pop %v904
        %907 = vrot.lane.b32.xlu0 %v905, 64
        %v908 = vpop.permute.xlu0 %907
        %v910 = vmul.f32 %v892, %v908
        %912 = vrot.lane.b32.xlu0 %v910, 32
        %v913 = vpop.permute.xlu0 %912
        %s915 = scalar_lea.vmem %s384, %s848 [#allocation11]
        %916 = vst.msk [vmem:[%s915] sm:$0xff] %vm495, %v913
        %s917 = scalar_select %p490, 6, 1
        %s918 = smul.u32 %s917, 8
        %s919 = scalar_lea.vmem [#allocation2], %s918
        %v920 = vld [vmem:[%s919] sm:$0xff]
        %v921 = vsel %vm495, %v913, 0
        %923 = vmatpush.msra.mxu0 0.0
        %924 = vmatpush.msra.mxu0 0.0
        %925 = vmatpush.msra.mxu0 0.0
        %926 = vmatpush.msra.mxu0 0.0
        %927 = vmatpush.msra.mxu0 0.0
        %928 = vmatpush.msra.mxu0 0.0
        %929 = vmatpush.msra.mxu0 0.0
        %930 = vmatpush.msra.mxu0 0.0
        %931 = vmatpush.msra.mxu0 0.0
        %932 = vmatpush.msra.mxu0 0.0
        %933 = vmatpush.msra.mxu0 0.0
        %934 = vmatpush.msra.mxu0 0.0
        %935 = vmatpush.msra.mxu0 %v486
        %936 = vmatpush.msra.mxu0 %v485
        %937 = vmatpush.msra.mxu0 %v484
        %938 = vmatpush.msra.mxu0 %v483
        %939 = vmatmul.f32.gmra.mxu0 %v921
        %v940 = vpop.f32.mrf.mxu0
        %v941 = vadd.f32 0.0, %v940
        %942 = vdwg.mxu0
        %v943 = vadd.f32 %v920, %v941
        %v944 = vxor.u32 %v943, 2147483648
        %v945 = vmul.f32 %v944, 1.442695
        %v946 = vpow.pop %v945
        %v947 = vadd.f32 %v946, 1.0
        %v948 = vrcp.pop %v947
        %v949 = vmul.f32 %v947, %v948
        %v950 = vsub.f32 1.0, %v949
        %v951 = vmul.f32 %v948, %v950
        %v952 = vadd.f32 %v948, %v951
        %vm953 = vweird.f32 %v947
        %vm954 = vweird.f32 %v948
        %vm955 = vmor %vm953, %vm954
        %v956 = vsel %vm955, %v948, %v952
        %v957 = vand.u32 2147483647, %v947
        %vm958 = vcmp.eq.f32.partialorder %v957, 8.507059e+37
        %v959 = vand.u32 %v947, 2147483648
        %v960 = vor.u32 1.1754944e-38, %v959
        %v961 = vsel %vm958, %v960, %v956
        %v962 = vmul.f32 1.0, %v961
        %v963 = vtanh.pop %v943
        %v964 = vmul.f32 %v962, %v904
        %966 = vrot.lane.b32.xlu0 %v963, 64
        %v967 = vpop.permute.xlu0 %966
        %v969 = vmul.f32 %v962, %v967
        %971 = vrot.lane.b32.xlu0 %v969, 32
        %v972 = vpop.permute.xlu0 %971
        %v974 = vadd.f32 %v964, %v972
        %v975 = vtanh.pop %v974
        %977 = vrot.lane.b32.xlu0 %v975, 64
        %v978 = vpop.permute.xlu0 %977
        %v980 = vmul.f32 %v962, %v978
        %982 = vrot.lane.b32.xlu0 %v980, 32
        %v983 = vpop.permute.xlu0 %982
        %s985 = scalar_lea.vmem %s384, %s918 [#allocation11]
        %986 = vst.msk [vmem:[%s985] sm:$0xff] %vm495, %v983
        %s987 = scalar_select %p490, 7, 0
        %s988 = smul.u32 %s987, 8
        %s989 = scalar_lea.vmem [#allocation2], %s988
        %v990 = vld [vmem:[%s989] sm:$0xff]
        %v991 = vsel %vm495, %v983, 0
        %993 = vmatpush.msra.mxu0 0.0
        %994 = vmatpush.msra.mxu0 0.0
        %995 = vmatpush.msra.mxu0 0.0
        %996 = vmatpush.msra.mxu0 0.0
        %997 = vmatpush.msra.mxu0 0.0
        %998 = vmatpush.msra.mxu0 0.0
        %999 = vmatpush.msra.mxu0 0.0
        %1000 = vmatpush.msra.mxu0 0.0
        %1001 = vmatpush.msra.mxu0 0.0
        %1002 = vmatpush.msra.mxu0 0.0
        %1003 = vmatpush.msra.mxu0 0.0
        %1004 = vmatpush.msra.mxu0 0.0
        %1005 = vmatpush.msra.mxu0 %v486
        %1006 = vmatpush.msra.mxu0 %v485
        %1007 = vmatpush.msra.mxu0 %v484
        %1008 = vmatpush.msra.mxu0 %v483
        %1009 = vmatmul.f32.gmra.mxu0 %v991
        %v1010 = vpop.f32.mrf.mxu0
        %v1011 = vadd.f32 0.0, %v1010
        %1012 = vdwg.mxu0
        %v1013 = vadd.f32 %v990, %v1011
        %v1014 = vxor.u32 %v1013, 2147483648
        %v1015 = vmul.f32 %v1014, 1.442695
        %v1016 = vpow.pop %v1015
        %v1017 = vadd.f32 %v1016, 1.0
        %v1018 = vrcp.pop %v1017
        %v1019 = vmul.f32 %v1017, %v1018
        %v1020 = vsub.f32 1.0, %v1019
        %v1021 = vmul.f32 %v1018, %v1020
        %v1022 = vadd.f32 %v1018, %v1021
        %vm1023 = vweird.f32 %v1017
        %vm1024 = vweird.f32 %v1018
        %vm1025 = vmor %vm1023, %vm1024
        %v1026 = vsel %vm1025, %v1018, %v1022
        %v1027 = vand.u32 2147483647, %v1017
        %vm1028 = vcmp.eq.f32.partialorder %v1027, 8.507059e+37
        %v1029 = vand.u32 %v1017, 2147483648
        %v1030 = vor.u32 1.1754944e-38, %v1029
        %v1031 = vsel %vm1028, %v1030, %v1026
        %v1032 = vmul.f32 1.0, %v1031
        %v1033 = vtanh.pop %v1013
        %v1034 = vmul.f32 %v1032, %v974
        %1036 = vrot.lane.b32.xlu0 %v1033, 64
        %v1037 = vpop.permute.xlu0 %1036
        %v1039 = vmul.f32 %v1032, %v1037
        %1041 = vrot.lane.b32.xlu0 %v1039, 32
        %v1042 = vpop.permute.xlu0 %1041
        %v1044 = vadd.f32 %v1034, %v1042
        %v1045 = vtanh.pop %v1044
        %1047 = vrot.lane.b32.xlu0 %v1045, 64
        %v1048 = vpop.permute.xlu0 %1047
        %v1050 = vmul.f32 %v1032, %v1048
        %1052 = vrot.lane.b32.xlu0 %v1050, 32
        %v1053 = vpop.permute.xlu0 %1052
        %s1055 = scalar_lea.vmem %s384, %s988 [#allocation11]
        %1056 = vst.msk [vmem:[%s1055] sm:$0xff] %vm495, %v1053
        %1057 = vst.msk [vmem:[%s391] sm:$0xff] %vm495, %v1053
        %1059 = vrot.lane.b32.xlu0 %v1044, 96
        %v1060 = vpop.permute.xlu0 %1059
        %s1062 = scalar_lea.vmem %s391, 8 [#allocation12]
        %1063 = vst.msk [vmem:[%s1062] sm:$0xff] %vm495, %v1060
        %s1064 = sand.u32 %s164, 1
        %s1065 = scalar_lea.sflag [#allocation5], %s1064
        %s1066 = sand.u32 %s164, 1
        %s1067 = smul.addr %s1066, 64
        %s1068 = scalar_lea.vmem [#allocation11], %s1067
        %s1069 = sand.u32 %s190, 1
        %s1070 = scalar_lea.sflag [#allocation13], %s1069
        %s1071 = sand.u32 %s190, 1
        %s1072 = smul.addr %s1071, 16
        %s1073 = scalar_lea.vmem [#allocation12], %s1072
        // Predicated region
        $region57: #{tpu_custom_call.1} parent=39 // pred_check
          %p1074 = pneg %p174
        $region58: #{tpu_custom_call.1} parent=39 // pred_check_branch
          %1076 = sbr.rel (%p1074) target = $region60
        $region59: #{tpu_custom_call.1} parent=39 // pred_region
          %1078 = vsyncadd %s1065, 0
          %s1079 = smul.addr %s31, 8
          %s1080 = smul.addr %s1079, 8
          %s1081 = scalar_lea.hbm %s5, %s1080
          %s1082 = sshll.u32 %s1068, 4
          %s1083 = int_to_ptr.vmem [resolvable:$true] %s1082
          %s1084 = sshll.u32 %s1081, 4
          %s1085 = int_to_ptr.hbm [resolvable:$true] %s1084
          %1090 = dma.vmem_to_hbm [thread:$0]  %s1083, 1024, %s1085, %s1065, 128, 128, 8
        $region60: #{tpu_custom_call.1} parent=39 // pred_fallthru
          _
        // Predicated region
        $region61: #{tpu_custom_call.1} parent=39 // pred_check
          %p1091 = pneg %p200
        $region62: #{tpu_custom_call.1} parent=39 // pred_check_branch
          %1093 = sbr.rel (%p1091) target = $region64
        $region63: #{tpu_custom_call.1} parent=39 // pred_region
          %1095 = vsyncadd %s1070, 0
          %s1096 = smul.addr %s31, 2
          %s1097 = smul.addr %s1096, 8
          %s1098 = scalar_lea.hbm %s6, %s1097
          %s1099 = sshll.u32 %s1073, 4
          %s1100 = int_to_ptr.vmem [resolvable:$true] %s1099
          %s1101 = sshll.u32 %s1098, 4
          %s1102 = int_to_ptr.hbm [resolvable:$true] %s1101
          %1107 = dma.vmem_to_hbm [thread:$0]  %s1100, 256, %s1102, %s1070, 128, 128, 8
        $region64: #{tpu_custom_call.1} parent=39 // pred_fallthru
          _
      $region40: #{tpu_custom_call.1} parent=5 // pred_fallthru
        _
      %p1108 = scmp.le.s32.totalorder 2, %s26
      // Predicated region
      $region65: #{tpu_custom_call.1} parent=5 // pred_check
        %p1109 = pneg %p1108
      $region66: #{tpu_custom_call.1} parent=5 // pred_check_branch
        %1111 = sbr.rel (%p1109) target = $region68
      $region67: #{tpu_custom_call.1} parent=5 // pred_region
        %s1112 = ssub.s32 %s26, 2
        // Predicated region
        $region69: #{tpu_custom_call.1} parent=67 // pred_check
          %p1113 = pneg %p180
        $region70: #{tpu_custom_call.1} parent=67 // pred_check_branch
          %1115 = sbr.rel (%p1113) target = $region72
        $region71: #{tpu_custom_call.1} parent=67 // pred_region
          %s1116 = sand.u32 %s165, 1
          %s1117 = scalar_lea.sflag [#allocation5], %s1116
          %s1118 = sand.u32 %s165, 1
          %s1119 = smul.addr %s1118, 64
          %s1120 = scalar_lea.vmem [#allocation11], %s1119
          %1122 = dma.done %s1117, 1024
        $region72: #{tpu_custom_call.1} parent=67 // pred_fallthru
          _
        // Predicated region
        $region73: #{tpu_custom_call.1} parent=67 // pred_check
          %p1123 = pneg %p206
        $region74: #{tpu_custom_call.1} parent=67 // pred_check_branch
          %1125 = sbr.rel (%p1123) target = $region76
        $region75: #{tpu_custom_call.1} parent=67 // pred_region
          %s1126 = sand.u32 %s191, 1
          %s1127 = scalar_lea.sflag [#allocation13], %s1126
          %s1128 = sand.u32 %s191, 1
          %s1129 = smul.addr %s1128, 16
          %s1130 = scalar_lea.vmem [#allocation12], %s1129
          %1132 = dma.done %s1127, 256
        $region76: #{tpu_custom_call.1} parent=67 // pred_fallthru
          _
      $region68: #{tpu_custom_call.1} parent=5 // pred_fallthru
        _
    $region6: #{tpu_custom_call.1} parent=1 // loop_footer
      %s30 = sadd.s32 1, %s26
    $region7: #{tpu_custom_call.1} parent=1 // loop_footer_branch
      %25 = sbr.rel target = $region3
    $region8: #{tpu_custom_call.1} parent=1 // loop_exit
      _
    %1133 = vsyncpa [#allocation4], 1
    %s1134 = scalar_lea.sflag [#allocation4], 1
    %1135 = vsyncpa %s1134, 1
    %1136 = vsyncpa [#allocation7], 1
    %s1137 = scalar_lea.sflag [#allocation7], 1
    %1138 = vsyncpa %s1137, 1
    %1139 = vsyncpa [#allocation10], 1
    %s1140 = scalar_lea.sflag [#allocation10], 1
    %1141 = vsyncpa %s1140, 1
    %1142 = vsyncpa [#allocation5], 1
    %s1143 = scalar_lea.sflag [#allocation5], 1
    %1144 = vsyncpa %s1143, 1
    %1145 = vsyncpa [#allocation13], 1
    %s1146 = scalar_lea.sflag [#allocation13], 1
    %1147 = vsyncpa %s1146, 1

</llo_original>
